<compile_context>
chip_gen: v6e
topology: v6e:2x2x1
jax: 0.10.0
libtpu: 0.0.40
codegen_flags: <defaults>
</compile_context>

<pallas_src>
import functools
import math

import jax
import jax.numpy as jnp
from jax.experimental import pallas as pl
from jax.experimental.pallas import tpu as pltpu


def _classifier_kernel(x_ref, w0_ref, b0_ref, wres_ref, bres_ref,
                       lw_ref, lb_ref, halo_ref, out_ref, *, seq_len):
    n_lanes = lw_ref.shape[1]                      # = batch_tile * seq_len, multiple of 128
    f32 = jnp.float32

    # Halo masks for the 4 shifted taps (offsets -2, -1, +1, +2): (1, n_lanes) each,
    # loaded once per grid step and broadcast over the H sublanes.
    halo = [halo_ref[j] for j in range(4)]

    def conv5(a, w_t, b):
        """'same' Conv1d(H, H, 5, padding=2) as ONE im2col MXU matmul.
        a: (H, N) f32 activations, w_t: (H, 5H) bf16, b: (H, 1) f32."""
        taps = []
        for k in range(5):
            off = k - 2
            if off == 0:
                t = a
            else:
                # tap[h, p] = a[h, p + off], zeroed where (p % L) + off leaves [0, L)
                rolled = pltpu.roll(a, shift=(-off) % n_lanes, axis=1)
                t = rolled * halo[k if k < 2 else k - 1]
            taps.append(t.astype(jnp.bfloat16))
        lhs = jnp.concatenate(taps, axis=0)        # (5H, N) bf16, sublane-axis stack
        out = jnp.dot(w_t, lhs, preferred_element_type=f32)   # (H, N) f32, lane-dense N
        return out + b                             # bias (H, 1) broadcasts over lanes

    # ---- Conv1d(n_chars, hidden, kernel_size=1): one channel matmul on the MXU ----
    x16 = x_ref[...].astype(jnp.bfloat16)          # (C, N)
    act = jnp.dot(w0_ref[...], x16, preferred_element_type=f32) + b0_ref[...]

    # ---- 5 x ResBlock:  x + 0.3 * conv(relu(conv(relu(x))))  (statically unrolled) ----
    for i in range(5):
        h = conv5(jnp.maximum(act, 0.0), wres_ref[2 * i], bres_ref[2 * i])
        h = conv5(jnp.maximum(h, 0.0), wres_ref[2 * i + 1], bres_ref[2 * i + 1])
        act = act + 0.3 * h

    # ---- Linear(seq_len*hidden, 1) + Sigmoid (all f32) ----
    # lw_ref[h, b*L + t] == torch_linear_weight[0, h*L + t]  (hidden-major flatten folded in).
    prod = act * lw_ref[...]                                   # (H, N)
    col = jnp.sum(prod, axis=0, keepdims=True)                 # (1, N) sublane reduce
    tot = col
    for t in range(1, seq_len):                                # per-batch sum ends up on
        tot = tot + pltpu.roll(col, shift=t, axis=1)           # lane b*L + (L-1)
    s = tot + lb_ref[...]                                      # (1, N) + (1, 1)
    out_ref[...] = 1.0 / (1.0 + jnp.exp(-s))                   # lane-dense sigmoid slab


def _choose_tb(batch, seq_len):
    """Pick (batch_tile, padded_batch).

    Lanes per grid step = tile*seq_len, always a multiple of 128 (the batch is zero-padded),
    so every conv matmul / VPU op / store is lane-dense and roll/concat lowerings stay on the
    native path.  Targets ~2048 lanes per step (fills MXU output columns, amortises the
    ~0.35us per-step overhead) and keeps >=2 grid steps when each step still gets >=1024
    lanes, so the 'parallel' axis can be sharded across v7x's two TensorCores.
    """
    unit = 128 // math.gcd(seq_len, 128)           # smallest tile with 128-aligned lanes
    b_pad = -(-batch // unit) * unit
    if b_pad * seq_len <= 4096:                    # small problem: 1 or 2 steps
        if b_pad % (2 * unit) == 0 and (b_pad // 2) * seq_len >= 1024:
            return b_pad // 2, b_pad
        return b_pad, b_pad
    tile = max(unit, (2048 // seq_len // unit) * unit)
    b_pad = -(-batch // tile) * tile
    return tile, b_pad


def binary_classificator(x, params):
    """x: (batch, seq_len, n_chars) float32 -- same input the PyTorch forward consumes."""
    B, L, C = x.shape
    H = params["conv1d_w"].shape[0]
    tb, b_pad = _choose_tb(B, L)
    nb = b_pad // tb
    n_lanes = tb * L

    # ---- activations -> (channels, batch*seq): batch*seq on the lane / MXU-N axis ----
    x_cn = jnp.transpose(x, (2, 0, 1)).reshape(C, B * L).astype(jnp.float32)
    if b_pad != B:
        x_cn = jnp.pad(x_cn, ((0, 0), (0, (b_pad - B) * L)))    # zero rows, masked at conv edges

    # ---- weights in matmul-ready layout (bf16 matmul operands, f32 biases) ----
    w0 = params["conv1d_w"][:, :, 0].astype(jnp.bfloat16)                         # (H, C)
    b0 = params["conv1d_b"].reshape(H, 1).astype(jnp.float32)                     # (H, 1)
    # im2col conv weight: wres[i][j, k*H + h] = torch res conv i weight[j, h, k]
    wres = jnp.transpose(params["res_w"], (0, 1, 3, 2)).reshape(10, H, 5 * H)
    wres = wres.astype(jnp.bfloat16)                                              # (10, H, 5H)
    bres = params["res_b"].reshape(10, H, 1).astype(jnp.float32)                  # (10, H, 1)
    # linear weight with the hidden-major flatten folded in: lwT[h, t] = W[0, h*L + t]
    lw_tiled = jnp.tile(params["linear_w"].reshape(H, L).astype(jnp.float32), (1, tb))
    lb = params["linear_b"].reshape(1, 1).astype(jnp.float32)

    # ---- halo masks for the four shifted conv taps (depend only on t = lane % L) ----
    t_idx = jnp.arange(n_lanes, dtype=jnp.int32) % L
    halo = jnp.stack([((t_idx + off >= 0) & (t_idx + off < L)).astype(jnp.float32)
                      for off in (-2, -1, 1, 2)]).reshape(4, 1, n_lanes)

    # Explicit VMEM budget (activations/taps/im2col for one tile + weights), generous 2x.
    est = n_lanes * (48 * H + 16 * C + 64) + 10 * H * 5 * H * 2
    vmem_limit = int(min(60 * 2**20, max(32 * 2**20, 2 * est)))

    grid_spec = pltpu.PrefetchScalarGridSpec(
        num_scalar_prefetch=0,
        grid=(nb,),
        in_specs=[
            pl.BlockSpec((C, n_lanes), lambda i: (0, i)),          # x (batch-tiled on lanes)
            pl.BlockSpec((H, C), lambda i: (0, 0)),                # 1x1 conv weight
            pl.BlockSpec((H, 1), lambda i: (0, 0)),                # 1x1 conv bias
            pl.BlockSpec((10, H, 5 * H), lambda i: (0, 0, 0)),     # 10 im2col conv weights
            pl.BlockSpec((10, H, 1), lambda i: (0, 0, 0)),         # 10 conv biases
            pl.BlockSpec((H, n_lanes), lambda i: (0, 0)),          # linear weight (lane-tiled)
            pl.BlockSpec((1, 1), lambda i: (0, 0)),                # linear bias
            pl.BlockSpec((4, 1, n_lanes), lambda i: (0, 0, 0)),    # halo masks
        ],
        out_specs=pl.BlockSpec((1, n_lanes), lambda i: (0, i)),    # lane-dense output slab
    )
    # TODO(synk): mark the grid-invariant weight specs pipeline_mode=pl.Buffered(1) once that
    # path is universally supported; the win is only ~200 KB of VMEM.

    out_full = pl.pallas_call(
        functools.partial(_classifier_kernel, seq_len=L),
        out_shape=jax.ShapeDtypeStruct((1, b_pad * L), jnp.float32),
        grid_spec=grid_spec,
        compiler_params=pltpu.CompilerParams(
            dimension_semantics=("parallel",),
            vmem_limit_bytes=vmem_limit),
    )(x_cn, w0, b0, wres, bres, lw_tiled, lb, halo)

    # per-batch sigmoid sits on lane b*L + (L-1); padded batches are discarded here
    return out_full[0, L - 1::L][:B].reshape(B, 1)


def reference(x, params, *, bf16_matmul=True):
    """Pure-JAX mirror of the PyTorch forward.  bf16_matmul=True applies the same bf16 cast
    at the conv matmul boundaries as the kernel (f32 accumulation); False = exact f32."""
    B, L, C = x.shape
    H = params["conv1d_w"].shape[0]
    cast = (lambda a: a.astype(jnp.bfloat16)) if bf16_matmul else (lambda a: a)

    # input.transpose(1, 2) -> Conv1d(n_chars, hidden, 1): (B, H, L)
    a = jnp.einsum("jc,btc->bjt", cast(params["conv1d_w"][:, :, 0]), cast(x),
                   preferred_element_type=jnp.float32)
    a = a + params["conv1d_b"][None, :, None]

    def conv5(h, w, b):            # h: (B, H, L), w: (H_out, H_in, 5), b: (H,)
        hp = jnp.pad(h, ((0, 0), (0, 0), (2, 2)))
        out = sum(jnp.einsum("ji,bit->bjt", cast(w[:, :, k]), cast(hp[:, :, k:k + L]),
                             preferred_element_type=jnp.float32) for k in range(5))
        return out + b[None, :, None]

    for i in range(5):
        skip = a
        h = conv5(jax.nn.relu(skip), params["res_w"][2 * i], params["res_b"][2 * i])
        h = conv5(jax.nn.relu(h), params["res_w"][2 * i + 1], params["res_b"][2 * i + 1])
        a = skip + 0.3 * h

    flat = a.reshape(B, H * L)                         # .view(-1, seq_len*hidden), hidden-major
    s = flat @ params["linear_w"].T + params["linear_b"]   # linear kept in f32 (as the kernel)
    return jax.nn.sigmoid(s)


if __name__ == "__main__":
    # small shapes consistent with the module: n_chars=4, seq_len=8, hidden=32, batch=2
    B, L, C, H = 2, 8, 4, 32
    key = jax.random.PRNGKey(0)
    ks = jax.random.split(key, 7)

    def uni(k, shape, fan_in):
        bound = 1.0 / float(fan_in) ** 0.5            # PyTorch default conv/linear init range
        return jax.random.uniform(k, shape, jnp.float32, -bound, bound)

    params = {
        "conv1d_w": uni(ks[0], (H, C, 1), C),         # nn.Conv1d(n_chars, hidden, 1)
        "conv1d_b": uni(ks[1], (H,), C),
        "res_w": uni(ks[2], (10, H, H, 5), 5 * H),    # 5 ResBlocks x 2 Conv1d(H, H, 5, pad=2)
        "res_b": uni(ks[3], (10, H), 5 * H),
        "linear_w": uni(ks[4], (1, L * H), L * H),    # nn.Linear(seq_len*hidden, 1)
        "linear_b": uni(ks[5], (1,), L * H),
    }
    x = jax.random.normal(ks[6], (B, L, C), jnp.float32)   # (batch, seq_len, n_chars)

    out = jax.block_until_ready(binary_classificator(x, params))
    assert out.shape == (B, 1), out.shape

    ref_matched = reference(x, params, bf16_matmul=True)   # same numerics as the kernel
    ref_f32 = reference(x, params, bf16_matmul=False)      # exact f32 PyTorch semantics
    assert jnp.allclose(out, ref_matched, rtol=2e-3, atol=2e-4), (out, ref_matched)
    assert jnp.allclose(out, ref_f32, rtol=1e-2, atol=5e-3), (out, ref_f32)
    print("KERNEL_OK")
</pallas_src>

<mosaic_0001>
module attributes {stable_mosaic.version = 11 : i64} {
  func.func @_classifier_kernel(%arg0: i32, %arg1: memref<4x128xf32, #tpu.memory_space<vmem>>, %arg2: memref<32x4xbf16, #tpu.memory_space<vmem>>, %arg3: memref<32x1xf32, #tpu.memory_space<vmem>>, %arg4: memref<10x32x160xbf16, #tpu.memory_space<vmem>>, %arg5: memref<10x32x1xf32, #tpu.memory_space<vmem>>, %arg6: memref<32x128xf32, #tpu.memory_space<vmem>>, %arg7: memref<1x1xf32, #tpu.memory_space<vmem>>, %arg8: memref<4x1x128xf32, #tpu.memory_space<vmem>>, %arg9: memref<1x128xf32, #tpu.memory_space<vmem>>) attributes {dimension_semantics = [#tpu.dimension_semantics<parallel>], iteration_bounds = array<i64: 1>, scalar_prefetch = 0 : i64, scratch_operands = 0 : i64, tpu.core_type = #tpu.core_type<tc>, window_params = [{transform_indices = @transform_0, window_bounds = array<i64: 4, 128>}, {pipeline_mode = #tpu.pipeline_mode<synchronous>, transform_indices = @transform_1, window_bounds = array<i64: 32, 4>}, {pipeline_mode = #tpu.pipeline_mode<synchronous>, transform_indices = @transform_2, window_bounds = array<i64: 32, 1>}, {pipeline_mode = #tpu.pipeline_mode<synchronous>, transform_indices = @transform_3, window_bounds = array<i64: 10, 32, 160>}, {pipeline_mode = #tpu.pipeline_mode<synchronous>, transform_indices = @transform_4, window_bounds = array<i64: 10, 32, 1>}, {pipeline_mode = #tpu.pipeline_mode<synchronous>, transform_indices = @transform_5, window_bounds = array<i64: 32, 128>}, {pipeline_mode = #tpu.pipeline_mode<synchronous>, transform_indices = @transform_6, window_bounds = array<i64: 1, 1>}, {pipeline_mode = #tpu.pipeline_mode<synchronous>, transform_indices = @transform_7, window_bounds = array<i64: 4, 1, 128>}, {transform_indices = @transform_8, window_bounds = array<i64: 1, 128>}]} {
    %c0 = arith.constant 0 : index
    %c0_0 = arith.constant 0 : index
    %c0_1 = arith.constant 0 : index
    %0 = vector.load %arg8[%c0, %c0_0, %c0_1] : memref<4x1x128xf32, #tpu.memory_space<vmem>>, vector<1x1x128xf32>
    %1 = vector.shape_cast %0 : vector<1x1x128xf32> to vector<1x128xf32>
    %c1 = arith.constant 1 : index
    %c0_2 = arith.constant 0 : index
    %c0_3 = arith.constant 0 : index
    %2 = vector.load %arg8[%c1, %c0_2, %c0_3] : memref<4x1x128xf32, #tpu.memory_space<vmem>>, vector<1x1x128xf32>
    %3 = vector.shape_cast %2 : vector<1x1x128xf32> to vector<1x128xf32>
    %c2 = arith.constant 2 : index
    %c0_4 = arith.constant 0 : index
    %c0_5 = arith.constant 0 : index
    %4 = vector.load %arg8[%c2, %c0_4, %c0_5] : memref<4x1x128xf32, #tpu.memory_space<vmem>>, vector<1x1x128xf32>
    %5 = vector.shape_cast %4 : vector<1x1x128xf32> to vector<1x128xf32>
    %c3 = arith.constant 3 : index
    %c0_6 = arith.constant 0 : index
    %c0_7 = arith.constant 0 : index
    %6 = vector.load %arg8[%c3, %c0_6, %c0_7] : memref<4x1x128xf32, #tpu.memory_space<vmem>>, vector<1x1x128xf32>
    %7 = vector.shape_cast %6 : vector<1x1x128xf32> to vector<1x128xf32>
    %c0_8 = arith.constant 0 : index
    %c0_9 = arith.constant 0 : index
    %8 = vector.load %arg1[%c0_8, %c0_9] : memref<4x128xf32, #tpu.memory_space<vmem>>, vector<4x128xf32>
    %9 = arith.truncf %8 : vector<4x128xf32> to vector<4x128xbf16>
    %c0_10 = arith.constant 0 : index
    %c0_11 = arith.constant 0 : index
    %10 = vector.load %arg2[%c0_10, %c0_11] : memref<32x4xbf16, #tpu.memory_space<vmem>>, vector<32x4xbf16>
    %cst = arith.constant dense<0.000000e+00> : vector<32x128xf32>
    %11 = tpu.matmul %10, %9, %cst {dimension_numbers = #tpu.dot_dimension_numbers<[1], [0], [0], [1], [0, 0, 1, 1], [], []>} : vector<32x4xbf16>, vector<4x128xbf16>, vector<32x128xf32> -> vector<32x128xf32>
    %c0_12 = arith.constant 0 : index
    %c0_13 = arith.constant 0 : index
    %12 = vector.load %arg3[%c0_12, %c0_13] : memref<32x1xf32, #tpu.memory_space<vmem>>, vector<32x1xf32>
    %13 = vector.broadcast %12 : vector<32x1xf32> to vector<32x128xf32>
    %14 = arith.addf %11, %13 : vector<32x128xf32>
    %cst_14 = arith.constant 0.000000e+00 : f32
    %15 = vector.broadcast %cst_14 : f32 to vector<32x128xf32>
    %16 = arith.maximumf %14, %15 : vector<32x128xf32>
    %c0_15 = arith.constant 0 : index
    %c0_16 = arith.constant 0 : index
    %c0_17 = arith.constant 0 : index
    %17 = vector.load %arg4[%c0_15, %c0_16, %c0_17] : memref<10x32x160xbf16, #tpu.memory_space<vmem>>, vector<1x32x160xbf16>
    %18 = vector.shape_cast %17 : vector<1x32x160xbf16> to vector<32x160xbf16>
    %c0_18 = arith.constant 0 : index
    %c0_19 = arith.constant 0 : index
    %c0_20 = arith.constant 0 : index
    %19 = vector.load %arg5[%c0_18, %c0_19, %c0_20] : memref<10x32x1xf32, #tpu.memory_space<vmem>>, vector<1x32x1xf32>
    %20 = vector.shape_cast %19 : vector<1x32x1xf32> to vector<32x1xf32>
    %c2_i32 = arith.constant 2 : i32
    %21 = tpu.dynamic_rotate %16 by %c2_i32 dim 1 : vector<32x128xf32>, i32 -> vector<32x128xf32>
    %22 = vector.broadcast %1 : vector<1x128xf32> to vector<32x128xf32>
    %23 = arith.mulf %21, %22 : vector<32x128xf32>
    %24 = arith.truncf %23 : vector<32x128xf32> to vector<32x128xbf16>
    %c1_i32 = arith.constant 1 : i32
    %25 = tpu.dynamic_rotate %16 by %c1_i32 dim 1 : vector<32x128xf32>, i32 -> vector<32x128xf32>
    %26 = vector.broadcast %3 : vector<1x128xf32> to vector<32x128xf32>
    %27 = arith.mulf %25, %26 : vector<32x128xf32>
    %28 = arith.truncf %27 : vector<32x128xf32> to vector<32x128xbf16>
    %29 = arith.truncf %16 : vector<32x128xf32> to vector<32x128xbf16>
    %c127_i32 = arith.constant 127 : i32
    %30 = tpu.dynamic_rotate %16 by %c127_i32 dim 1 : vector<32x128xf32>, i32 -> vector<32x128xf32>
    %31 = vector.broadcast %5 : vector<1x128xf32> to vector<32x128xf32>
    %32 = arith.mulf %30, %31 : vector<32x128xf32>
    %33 = arith.truncf %32 : vector<32x128xf32> to vector<32x128xbf16>
    %c126_i32 = arith.constant 126 : i32
    %34 = tpu.dynamic_rotate %16 by %c126_i32 dim 1 : vector<32x128xf32>, i32 -> vector<32x128xf32>
    %35 = vector.broadcast %7 : vector<1x128xf32> to vector<32x128xf32>
    %36 = arith.mulf %34, %35 : vector<32x128xf32>
    %37 = arith.truncf %36 : vector<32x128xf32> to vector<32x128xbf16>
    %38 = tpu.concatenate %24, %28, %29, %33, %37 in 0 : vector<32x128xbf16>, vector<32x128xbf16>, vector<32x128xbf16>, vector<32x128xbf16>, vector<32x128xbf16> -> vector<160x128xbf16>
    %cst_21 = arith.constant dense<0.000000e+00> : vector<32x128xf32>
    %39 = tpu.matmul %18, %38, %cst_21 {dimension_numbers = #tpu.dot_dimension_numbers<[1], [0], [0], [1], [0, 0, 1, 1], [], []>} : vector<32x160xbf16>, vector<160x128xbf16>, vector<32x128xf32> -> vector<32x128xf32>
    %40 = vector.broadcast %20 : vector<32x1xf32> to vector<32x128xf32>
    %41 = arith.addf %39, %40 : vector<32x128xf32>
    %cst_22 = arith.constant 0.000000e+00 : f32
    %42 = vector.broadcast %cst_22 : f32 to vector<32x128xf32>
    %43 = arith.maximumf %41, %42 : vector<32x128xf32>
    %c1_23 = arith.constant 1 : index
    %c0_24 = arith.constant 0 : index
    %c0_25 = arith.constant 0 : index
    %44 = vector.load %arg4[%c1_23, %c0_24, %c0_25] : memref<10x32x160xbf16, #tpu.memory_space<vmem>>, vector<1x32x160xbf16>
    %45 = vector.shape_cast %44 : vector<1x32x160xbf16> to vector<32x160xbf16>
    %c1_26 = arith.constant 1 : index
    %c0_27 = arith.constant 0 : index
    %c0_28 = arith.constant 0 : index
    %46 = vector.load %arg5[%c1_26, %c0_27, %c0_28] : memref<10x32x1xf32, #tpu.memory_space<vmem>>, vector<1x32x1xf32>
    %47 = vector.shape_cast %46 : vector<1x32x1xf32> to vector<32x1xf32>
    %c2_i32_29 = arith.constant 2 : i32
    %48 = tpu.dynamic_rotate %43 by %c2_i32_29 dim 1 : vector<32x128xf32>, i32 -> vector<32x128xf32>
    %49 = vector.broadcast %1 : vector<1x128xf32> to vector<32x128xf32>
    %50 = arith.mulf %48, %49 : vector<32x128xf32>
    %51 = arith.truncf %50 : vector<32x128xf32> to vector<32x128xbf16>
    %c1_i32_30 = arith.constant 1 : i32
    %52 = tpu.dynamic_rotate %43 by %c1_i32_30 dim 1 : vector<32x128xf32>, i32 -> vector<32x128xf32>
    %53 = vector.broadcast %3 : vector<1x128xf32> to vector<32x128xf32>
    %54 = arith.mulf %52, %53 : vector<32x128xf32>
    %55 = arith.truncf %54 : vector<32x128xf32> to vector<32x128xbf16>
    %56 = arith.truncf %43 : vector<32x128xf32> to vector<32x128xbf16>
    %c127_i32_31 = arith.constant 127 : i32
    %57 = tpu.dynamic_rotate %43 by %c127_i32_31 dim 1 : vector<32x128xf32>, i32 -> vector<32x128xf32>
    %58 = vector.broadcast %5 : vector<1x128xf32> to vector<32x128xf32>
    %59 = arith.mulf %57, %58 : vector<32x128xf32>
    %60 = arith.truncf %59 : vector<32x128xf32> to vector<32x128xbf16>
    %c126_i32_32 = arith.constant 126 : i32
    %61 = tpu.dynamic_rotate %43 by %c126_i32_32 dim 1 : vector<32x128xf32>, i32 -> vector<32x128xf32>
    %62 = vector.broadcast %7 : vector<1x128xf32> to vector<32x128xf32>
    %63 = arith.mulf %61, %62 : vector<32x128xf32>
    %64 = arith.truncf %63 : vector<32x128xf32> to vector<32x128xbf16>
    %65 = tpu.concatenate %51, %55, %56, %60, %64 in 0 : vector<32x128xbf16>, vector<32x128xbf16>, vector<32x128xbf16>, vector<32x128xbf16>, vector<32x128xbf16> -> vector<160x128xbf16>
    %cst_33 = arith.constant dense<0.000000e+00> : vector<32x128xf32>
    %66 = tpu.matmul %45, %65, %cst_33 {dimension_numbers = #tpu.dot_dimension_numbers<[1], [0], [0], [1], [0, 0, 1, 1], [], []>} : vector<32x160xbf16>, vector<160x128xbf16>, vector<32x128xf32> -> vector<32x128xf32>
    %67 = vector.broadcast %47 : vector<32x1xf32> to vector<32x128xf32>
    %68 = arith.addf %66, %67 : vector<32x128xf32>
    %cst_34 = arith.constant 3.000000e-01 : f32
    %69 = vector.broadcast %cst_34 : f32 to vector<32x128xf32>
    %70 = arith.mulf %69, %68 : vector<32x128xf32>
    %71 = arith.addf %14, %70 : vector<32x128xf32>
    %cst_35 = arith.constant 0.000000e+00 : f32
    %72 = vector.broadcast %cst_35 : f32 to vector<32x128xf32>
    %73 = arith.maximumf %71, %72 : vector<32x128xf32>
    %c2_36 = arith.constant 2 : index
    %c0_37 = arith.constant 0 : index
    %c0_38 = arith.constant 0 : index
    %74 = vector.load %arg4[%c2_36, %c0_37, %c0_38] : memref<10x32x160xbf16, #tpu.memory_space<vmem>>, vector<1x32x160xbf16>
    %75 = vector.shape_cast %74 : vector<1x32x160xbf16> to vector<32x160xbf16>
    %c2_39 = arith.constant 2 : index
    %c0_40 = arith.constant 0 : index
    %c0_41 = arith.constant 0 : index
    %76 = vector.load %arg5[%c2_39, %c0_40, %c0_41] : memref<10x32x1xf32, #tpu.memory_space<vmem>>, vector<1x32x1xf32>
    %77 = vector.shape_cast %76 : vector<1x32x1xf32> to vector<32x1xf32>
    %c2_i32_42 = arith.constant 2 : i32
    %78 = tpu.dynamic_rotate %73 by %c2_i32_42 dim 1 : vector<32x128xf32>, i32 -> vector<32x128xf32>
    %79 = vector.broadcast %1 : vector<1x128xf32> to vector<32x128xf32>
    %80 = arith.mulf %78, %79 : vector<32x128xf32>
    %81 = arith.truncf %80 : vector<32x128xf32> to vector<32x128xbf16>
    %c1_i32_43 = arith.constant 1 : i32
    %82 = tpu.dynamic_rotate %73 by %c1_i32_43 dim 1 : vector<32x128xf32>, i32 -> vector<32x128xf32>
    %83 = vector.broadcast %3 : vector<1x128xf32> to vector<32x128xf32>
    %84 = arith.mulf %82, %83 : vector<32x128xf32>
    %85 = arith.truncf %84 : vector<32x128xf32> to vector<32x128xbf16>
    %86 = arith.truncf %73 : vector<32x128xf32> to vector<32x128xbf16>
    %c127_i32_44 = arith.constant 127 : i32
    %87 = tpu.dynamic_rotate %73 by %c127_i32_44 dim 1 : vector<32x128xf32>, i32 -> vector<32x128xf32>
    %88 = vector.broadcast %5 : vector<1x128xf32> to vector<32x128xf32>
    %89 = arith.mulf %87, %88 : vector<32x128xf32>
    %90 = arith.truncf %89 : vector<32x128xf32> to vector<32x128xbf16>
    %c126_i32_45 = arith.constant 126 : i32
    %91 = tpu.dynamic_rotate %73 by %c126_i32_45 dim 1 : vector<32x128xf32>, i32 -> vector<32x128xf32>
    %92 = vector.broadcast %7 : vector<1x128xf32> to vector<32x128xf32>
    %93 = arith.mulf %91, %92 : vector<32x128xf32>
    %94 = arith.truncf %93 : vector<32x128xf32> to vector<32x128xbf16>
    %95 = tpu.concatenate %81, %85, %86, %90, %94 in 0 : vector<32x128xbf16>, vector<32x128xbf16>, vector<32x128xbf16>, vector<32x128xbf16>, vector<32x128xbf16> -> vector<160x128xbf16>
    %cst_46 = arith.constant dense<0.000000e+00> : vector<32x128xf32>
    %96 = tpu.matmul %75, %95, %cst_46 {dimension_numbers = #tpu.dot_dimension_numbers<[1], [0], [0], [1], [0, 0, 1, 1], [], []>} : vector<32x160xbf16>, vector<160x128xbf16>, vector<32x128xf32> -> vector<32x128xf32>
    %97 = vector.broadcast %77 : vector<32x1xf32> to vector<32x128xf32>
    %98 = arith.addf %96, %97 : vector<32x128xf32>
    %cst_47 = arith.constant 0.000000e+00 : f32
    %99 = vector.broadcast %cst_47 : f32 to vector<32x128xf32>
    %100 = arith.maximumf %98, %99 : vector<32x128xf32>
    %c3_48 = arith.constant 3 : index
    %c0_49 = arith.constant 0 : index
    %c0_50 = arith.constant 0 : index
    %101 = vector.load %arg4[%c3_48, %c0_49, %c0_50] : memref<10x32x160xbf16, #tpu.memory_space<vmem>>, vector<1x32x160xbf16>
    %102 = vector.shape_cast %101 : vector<1x32x160xbf16> to vector<32x160xbf16>
    %c3_51 = arith.constant 3 : index
    %c0_52 = arith.constant 0 : index
    %c0_53 = arith.constant 0 : index
    %103 = vector.load %arg5[%c3_51, %c0_52, %c0_53] : memref<10x32x1xf32, #tpu.memory_space<vmem>>, vector<1x32x1xf32>
    %104 = vector.shape_cast %103 : vector<1x32x1xf32> to vector<32x1xf32>
    %c2_i32_54 = arith.constant 2 : i32
    %105 = tpu.dynamic_rotate %100 by %c2_i32_54 dim 1 : vector<32x128xf32>, i32 -> vector<32x128xf32>
    %106 = vector.broadcast %1 : vector<1x128xf32> to vector<32x128xf32>
    %107 = arith.mulf %105, %106 : vector<32x128xf32>
    %108 = arith.truncf %107 : vector<32x128xf32> to vector<32x128xbf16>
    %c1_i32_55 = arith.constant 1 : i32
    %109 = tpu.dynamic_rotate %100 by %c1_i32_55 dim 1 : vector<32x128xf32>, i32 -> vector<32x128xf32>
    %110 = vector.broadcast %3 : vector<1x128xf32> to vector<32x128xf32>
    %111 = arith.mulf %109, %110 : vector<32x128xf32>
    %112 = arith.truncf %111 : vector<32x128xf32> to vector<32x128xbf16>
    %113 = arith.truncf %100 : vector<32x128xf32> to vector<32x128xbf16>
    %c127_i32_56 = arith.constant 127 : i32
    %114 = tpu.dynamic_rotate %100 by %c127_i32_56 dim 1 : vector<32x128xf32>, i32 -> vector<32x128xf32>
    %115 = vector.broadcast %5 : vector<1x128xf32> to vector<32x128xf32>
    %116 = arith.mulf %114, %115 : vector<32x128xf32>
    %117 = arith.truncf %116 : vector<32x128xf32> to vector<32x128xbf16>
    %c126_i32_57 = arith.constant 126 : i32
    %118 = tpu.dynamic_rotate %100 by %c126_i32_57 dim 1 : vector<32x128xf32>, i32 -> vector<32x128xf32>
    %119 = vector.broadcast %7 : vector<1x128xf32> to vector<32x128xf32>
    %120 = arith.mulf %118, %119 : vector<32x128xf32>
    %121 = arith.truncf %120 : vector<32x128xf32> to vector<32x128xbf16>
    %122 = tpu.concatenate %108, %112, %113, %117, %121 in 0 : vector<32x128xbf16>, vector<32x128xbf16>, vector<32x128xbf16>, vector<32x128xbf16>, vector<32x128xbf16> -> vector<160x128xbf16>
    %cst_58 = arith.constant dense<0.000000e+00> : vector<32x128xf32>
    %123 = tpu.matmul %102, %122, %cst_58 {dimension_numbers = #tpu.dot_dimension_numbers<[1], [0], [0], [1], [0, 0, 1, 1], [], []>} : vector<32x160xbf16>, vector<160x128xbf16>, vector<32x128xf32> -> vector<32x128xf32>
    %124 = vector.broadcast %104 : vector<32x1xf32> to vector<32x128xf32>
    %125 = arith.addf %123, %124 : vector<32x128xf32>
    %cst_59 = arith.constant 3.000000e-01 : f32
    %126 = vector.broadcast %cst_59 : f32 to vector<32x128xf32>
    %127 = arith.mulf %126, %125 : vector<32x128xf32>
    %128 = arith.addf %71, %127 : vector<32x128xf32>
    %cst_60 = arith.constant 0.000000e+00 : f32
    %129 = vector.broadcast %cst_60 : f32 to vector<32x128xf32>
    %130 = arith.maximumf %128, %129 : vector<32x128xf32>
    %c4 = arith.constant 4 : index
    %c0_61 = arith.constant 0 : index
    %c0_62 = arith.constant 0 : index
    %131 = vector.load %arg4[%c4, %c0_61, %c0_62] : memref<10x32x160xbf16, #tpu.memory_space<vmem>>, vector<1x32x160xbf16>
    %132 = vector.shape_cast %131 : vector<1x32x160xbf16> to vector<32x160xbf16>
    %c4_63 = arith.constant 4 : index
    %c0_64 = arith.constant 0 : index
    %c0_65 = arith.constant 0 : index
    %133 = vector.load %arg5[%c4_63, %c0_64, %c0_65] : memref<10x32x1xf32, #tpu.memory_space<vmem>>, vector<1x32x1xf32>
    %134 = vector.shape_cast %133 : vector<1x32x1xf32> to vector<32x1xf32>
    %c2_i32_66 = arith.constant 2 : i32
    %135 = tpu.dynamic_rotate %130 by %c2_i32_66 dim 1 : vector<32x128xf32>, i32 -> vector<32x128xf32>
    %136 = vector.broadcast %1 : vector<1x128xf32> to vector<32x128xf32>
    %137 = arith.mulf %135, %136 : vector<32x128xf32>
    %138 = arith.truncf %137 : vector<32x128xf32> to vector<32x128xbf16>
    %c1_i32_67 = arith.constant 1 : i32
    %139 = tpu.dynamic_rotate %130 by %c1_i32_67 dim 1 : vector<32x128xf32>, i32 -> vector<32x128xf32>
    %140 = vector.broadcast %3 : vector<1x128xf32> to vector<32x128xf32>
    %141 = arith.mulf %139, %140 : vector<32x128xf32>
    %142 = arith.truncf %141 : vector<32x128xf32> to vector<32x128xbf16>
    %143 = arith.truncf %130 : vector<32x128xf32> to vector<32x128xbf16>
    %c127_i32_68 = arith.constant 127 : i32
    %144 = tpu.dynamic_rotate %130 by %c127_i32_68 dim 1 : vector<32x128xf32>, i32 -> vector<32x128xf32>
    %145 = vector.broadcast %5 : vector<1x128xf32> to vector<32x128xf32>
    %146 = arith.mulf %144, %145 : vector<32x128xf32>
    %147 = arith.truncf %146 : vector<32x128xf32> to vector<32x128xbf16>
    %c126_i32_69 = arith.constant 126 : i32
    %148 = tpu.dynamic_rotate %130 by %c126_i32_69 dim 1 : vector<32x128xf32>, i32 -> vector<32x128xf32>
    %149 = vector.broadcast %7 : vector<1x128xf32> to vector<32x128xf32>
    %150 = arith.mulf %148, %149 : vector<32x128xf32>
    %151 = arith.truncf %150 : vector<32x128xf32> to vector<32x128xbf16>
    %152 = tpu.concatenate %138, %142, %143, %147, %151 in 0 : vector<32x128xbf16>, vector<32x128xbf16>, vector<32x128xbf16>, vector<32x128xbf16>, vector<32x128xbf16> -> vector<160x128xbf16>
    %cst_70 = arith.constant dense<0.000000e+00> : vector<32x128xf32>
    %153 = tpu.matmul %132, %152, %cst_70 {dimension_numbers = #tpu.dot_dimension_numbers<[1], [0], [0], [1], [0, 0, 1, 1], [], []>} : vector<32x160xbf16>, vector<160x128xbf16>, vector<32x128xf32> -> vector<32x128xf32>
    %154 = vector.broadcast %134 : vector<32x1xf32> to vector<32x128xf32>
    %155 = arith.addf %153, %154 : vector<32x128xf32>
    %cst_71 = arith.constant 0.000000e+00 : f32
    %156 = vector.broadcast %cst_71 : f32 to vector<32x128xf32>
    %157 = arith.maximumf %155, %156 : vector<32x128xf32>
    %c5 = arith.constant 5 : index
    %c0_72 = arith.constant 0 : index
    %c0_73 = arith.constant 0 : index
    %158 = vector.load %arg4[%c5, %c0_72, %c0_73] : memref<10x32x160xbf16, #tpu.memory_space<vmem>>, vector<1x32x160xbf16>
    %159 = vector.shape_cast %158 : vector<1x32x160xbf16> to vector<32x160xbf16>
    %c5_74 = arith.constant 5 : index
    %c0_75 = arith.constant 0 : index
    %c0_76 = arith.constant 0 : index
    %160 = vector.load %arg5[%c5_74, %c0_75, %c0_76] : memref<10x32x1xf32, #tpu.memory_space<vmem>>, vector<1x32x1xf32>
    %161 = vector.shape_cast %160 : vector<1x32x1xf32> to vector<32x1xf32>
    %c2_i32_77 = arith.constant 2 : i32
    %162 = tpu.dynamic_rotate %157 by %c2_i32_77 dim 1 : vector<32x128xf32>, i32 -> vector<32x128xf32>
    %163 = vector.broadcast %1 : vector<1x128xf32> to vector<32x128xf32>
    %164 = arith.mulf %162, %163 : vector<32x128xf32>
    %165 = arith.truncf %164 : vector<32x128xf32> to vector<32x128xbf16>
    %c1_i32_78 = arith.constant 1 : i32
    %166 = tpu.dynamic_rotate %157 by %c1_i32_78 dim 1 : vector<32x128xf32>, i32 -> vector<32x128xf32>
    %167 = vector.broadcast %3 : vector<1x128xf32> to vector<32x128xf32>
    %168 = arith.mulf %166, %167 : vector<32x128xf32>
    %169 = arith.truncf %168 : vector<32x128xf32> to vector<32x128xbf16>
    %170 = arith.truncf %157 : vector<32x128xf32> to vector<32x128xbf16>
    %c127_i32_79 = arith.constant 127 : i32
    %171 = tpu.dynamic_rotate %157 by %c127_i32_79 dim 1 : vector<32x128xf32>, i32 -> vector<32x128xf32>
    %172 = vector.broadcast %5 : vector<1x128xf32> to vector<32x128xf32>
    %173 = arith.mulf %171, %172 : vector<32x128xf32>
    %174 = arith.truncf %173 : vector<32x128xf32> to vector<32x128xbf16>
    %c126_i32_80 = arith.constant 126 : i32
    %175 = tpu.dynamic_rotate %157 by %c126_i32_80 dim 1 : vector<32x128xf32>, i32 -> vector<32x128xf32>
    %176 = vector.broadcast %7 : vector<1x128xf32> to vector<32x128xf32>
    %177 = arith.mulf %175, %176 : vector<32x128xf32>
    %178 = arith.truncf %177 : vector<32x128xf32> to vector<32x128xbf16>
    %179 = tpu.concatenate %165, %169, %170, %174, %178 in 0 : vector<32x128xbf16>, vector<32x128xbf16>, vector<32x128xbf16>, vector<32x128xbf16>, vector<32x128xbf16> -> vector<160x128xbf16>
    %cst_81 = arith.constant dense<0.000000e+00> : vector<32x128xf32>
    %180 = tpu.matmul %159, %179, %cst_81 {dimension_numbers = #tpu.dot_dimension_numbers<[1], [0], [0], [1], [0, 0, 1, 1], [], []>} : vector<32x160xbf16>, vector<160x128xbf16>, vector<32x128xf32> -> vector<32x128xf32>
    %181 = vector.broadcast %161 : vector<32x1xf32> to vector<32x128xf32>
    %182 = arith.addf %180, %181 : vector<32x128xf32>
    %cst_82 = arith.constant 3.000000e-01 : f32
    %183 = vector.broadcast %cst_82 : f32 to vector<32x128xf32>
    %184 = arith.mulf %183, %182 : vector<32x128xf32>
    %185 = arith.addf %128, %184 : vector<32x128xf32>
    %cst_83 = arith.constant 0.000000e+00 : f32
    %186 = vector.broadcast %cst_83 : f32 to vector<32x128xf32>
    %187 = arith.maximumf %185, %186 : vector<32x128xf32>
    %c6 = arith.constant 6 : index
    %c0_84 = arith.constant 0 : index
    %c0_85 = arith.constant 0 : index
    %188 = vector.load %arg4[%c6, %c0_84, %c0_85] : memref<10x32x160xbf16, #tpu.memory_space<vmem>>, vector<1x32x160xbf16>
    %189 = vector.shape_cast %188 : vector<1x32x160xbf16> to vector<32x160xbf16>
    %c6_86 = arith.constant 6 : index
    %c0_87 = arith.constant 0 : index
    %c0_88 = arith.constant 0 : index
    %190 = vector.load %arg5[%c6_86, %c0_87, %c0_88] : memref<10x32x1xf32, #tpu.memory_space<vmem>>, vector<1x32x1xf32>
    %191 = vector.shape_cast %190 : vector<1x32x1xf32> to vector<32x1xf32>
    %c2_i32_89 = arith.constant 2 : i32
    %192 = tpu.dynamic_rotate %187 by %c2_i32_89 dim 1 : vector<32x128xf32>, i32 -> vector<32x128xf32>
    %193 = vector.broadcast %1 : vector<1x128xf32> to vector<32x128xf32>
    %194 = arith.mulf %192, %193 : vector<32x128xf32>
    %195 = arith.truncf %194 : vector<32x128xf32> to vector<32x128xbf16>
    %c1_i32_90 = arith.constant 1 : i32
    %196 = tpu.dynamic_rotate %187 by %c1_i32_90 dim 1 : vector<32x128xf32>, i32 -> vector<32x128xf32>
    %197 = vector.broadcast %3 : vector<1x128xf32> to vector<32x128xf32>
    %198 = arith.mulf %196, %197 : vector<32x128xf32>
    %199 = arith.truncf %198 : vector<32x128xf32> to vector<32x128xbf16>
    %200 = arith.truncf %187 : vector<32x128xf32> to vector<32x128xbf16>
    %c127_i32_91 = arith.constant 127 : i32
    %201 = tpu.dynamic_rotate %187 by %c127_i32_91 dim 1 : vector<32x128xf32>, i32 -> vector<32x128xf32>
    %202 = vector.broadcast %5 : vector<1x128xf32> to vector<32x128xf32>
    %203 = arith.mulf %201, %202 : vector<32x128xf32>
    %204 = arith.truncf %203 : vector<32x128xf32> to vector<32x128xbf16>
    %c126_i32_92 = arith.constant 126 : i32
    %205 = tpu.dynamic_rotate %187 by %c126_i32_92 dim 1 : vector<32x128xf32>, i32 -> vector<32x128xf32>
    %206 = vector.broadcast %7 : vector<1x128xf32> to vector<32x128xf32>
    %207 = arith.mulf %205, %206 : vector<32x128xf32>
    %208 = arith.truncf %207 : vector<32x128xf32> to vector<32x128xbf16>
    %209 = tpu.concatenate %195, %199, %200, %204, %208 in 0 : vector<32x128xbf16>, vector<32x128xbf16>, vector<32x128xbf16>, vector<32x128xbf16>, vector<32x128xbf16> -> vector<160x128xbf16>
    %cst_93 = arith.constant dense<0.000000e+00> : vector<32x128xf32>
    %210 = tpu.matmul %189, %209, %cst_93 {dimension_numbers = #tpu.dot_dimension_numbers<[1], [0], [0], [1], [0, 0, 1, 1], [], []>} : vector<32x160xbf16>, vector<160x128xbf16>, vector<32x128xf32> -> vector<32x128xf32>
    %211 = vector.broadcast %191 : vector<32x1xf32> to vector<32x128xf32>
    %212 = arith.addf %210, %211 : vector<32x128xf32>
    %cst_94 = arith.constant 0.000000e+00 : f32
    %213 = vector.broadcast %cst_94 : f32 to vector<32x128xf32>
    %214 = arith.maximumf %212, %213 : vector<32x128xf32>
    %c7 = arith.constant 7 : index
    %c0_95 = arith.constant 0 : index
    %c0_96 = arith.constant 0 : index
    %215 = vector.load %arg4[%c7, %c0_95, %c0_96] : memref<10x32x160xbf16, #tpu.memory_space<vmem>>, vector<1x32x160xbf16>
    %216 = vector.shape_cast %215 : vector<1x32x160xbf16> to vector<32x160xbf16>
    %c7_97 = arith.constant 7 : index
    %c0_98 = arith.constant 0 : index
    %c0_99 = arith.constant 0 : index
    %217 = vector.load %arg5[%c7_97, %c0_98, %c0_99] : memref<10x32x1xf32, #tpu.memory_space<vmem>>, vector<1x32x1xf32>
    %218 = vector.shape_cast %217 : vector<1x32x1xf32> to vector<32x1xf32>
    %c2_i32_100 = arith.constant 2 : i32
    %219 = tpu.dynamic_rotate %214 by %c2_i32_100 dim 1 : vector<32x128xf32>, i32 -> vector<32x128xf32>
    %220 = vector.broadcast %1 : vector<1x128xf32> to vector<32x128xf32>
    %221 = arith.mulf %219, %220 : vector<32x128xf32>
    %222 = arith.truncf %221 : vector<32x128xf32> to vector<32x128xbf16>
    %c1_i32_101 = arith.constant 1 : i32
    %223 = tpu.dynamic_rotate %214 by %c1_i32_101 dim 1 : vector<32x128xf32>, i32 -> vector<32x128xf32>
    %224 = vector.broadcast %3 : vector<1x128xf32> to vector<32x128xf32>
    %225 = arith.mulf %223, %224 : vector<32x128xf32>
    %226 = arith.truncf %225 : vector<32x128xf32> to vector<32x128xbf16>
    %227 = arith.truncf %214 : vector<32x128xf32> to vector<32x128xbf16>
    %c127_i32_102 = arith.constant 127 : i32
    %228 = tpu.dynamic_rotate %214 by %c127_i32_102 dim 1 : vector<32x128xf32>, i32 -> vector<32x128xf32>
    %229 = vector.broadcast %5 : vector<1x128xf32> to vector<32x128xf32>
    %230 = arith.mulf %228, %229 : vector<32x128xf32>
    %231 = arith.truncf %230 : vector<32x128xf32> to vector<32x128xbf16>
    %c126_i32_103 = arith.constant 126 : i32
    %232 = tpu.dynamic_rotate %214 by %c126_i32_103 dim 1 : vector<32x128xf32>, i32 -> vector<32x128xf32>
    %233 = vector.broadcast %7 : vector<1x128xf32> to vector<32x128xf32>
    %234 = arith.mulf %232, %233 : vector<32x128xf32>
    %235 = arith.truncf %234 : vector<32x128xf32> to vector<32x128xbf16>
    %236 = tpu.concatenate %222, %226, %227, %231, %235 in 0 : vector<32x128xbf16>, vector<32x128xbf16>, vector<32x128xbf16>, vector<32x128xbf16>, vector<32x128xbf16> -> vector<160x128xbf16>
    %cst_104 = arith.constant dense<0.000000e+00> : vector<32x128xf32>
    %237 = tpu.matmul %216, %236, %cst_104 {dimension_numbers = #tpu.dot_dimension_numbers<[1], [0], [0], [1], [0, 0, 1, 1], [], []>} : vector<32x160xbf16>, vector<160x128xbf16>, vector<32x128xf32> -> vector<32x128xf32>
    %238 = vector.broadcast %218 : vector<32x1xf32> to vector<32x128xf32>
    %239 = arith.addf %237, %238 : vector<32x128xf32>
    %cst_105 = arith.constant 3.000000e-01 : f32
    %240 = vector.broadcast %cst_105 : f32 to vector<32x128xf32>
    %241 = arith.mulf %240, %239 : vector<32x128xf32>
    %242 = arith.addf %185, %241 : vector<32x128xf32>
    %cst_106 = arith.constant 0.000000e+00 : f32
    %243 = vector.broadcast %cst_106 : f32 to vector<32x128xf32>
    %244 = arith.maximumf %242, %243 : vector<32x128xf32>
    %c8 = arith.constant 8 : index
    %c0_107 = arith.constant 0 : index
    %c0_108 = arith.constant 0 : index
    %245 = vector.load %arg4[%c8, %c0_107, %c0_108] : memref<10x32x160xbf16, #tpu.memory_space<vmem>>, vector<1x32x160xbf16>
    %246 = vector.shape_cast %245 : vector<1x32x160xbf16> to vector<32x160xbf16>
    %c8_109 = arith.constant 8 : index
    %c0_110 = arith.constant 0 : index
    %c0_111 = arith.constant 0 : index
    %247 = vector.load %arg5[%c8_109, %c0_110, %c0_111] : memref<10x32x1xf32, #tpu.memory_space<vmem>>, vector<1x32x1xf32>
    %248 = vector.shape_cast %247 : vector<1x32x1xf32> to vector<32x1xf32>
    %c2_i32_112 = arith.constant 2 : i32
    %249 = tpu.dynamic_rotate %244 by %c2_i32_112 dim 1 : vector<32x128xf32>, i32 -> vector<32x128xf32>
    %250 = vector.broadcast %1 : vector<1x128xf32> to vector<32x128xf32>
    %251 = arith.mulf %249, %250 : vector<32x128xf32>
    %252 = arith.truncf %251 : vector<32x128xf32> to vector<32x128xbf16>
    %c1_i32_113 = arith.constant 1 : i32
    %253 = tpu.dynamic_rotate %244 by %c1_i32_113 dim 1 : vector<32x128xf32>, i32 -> vector<32x128xf32>
    %254 = vector.broadcast %3 : vector<1x128xf32> to vector<32x128xf32>
    %255 = arith.mulf %253, %254 : vector<32x128xf32>
    %256 = arith.truncf %255 : vector<32x128xf32> to vector<32x128xbf16>
    %257 = arith.truncf %244 : vector<32x128xf32> to vector<32x128xbf16>
    %c127_i32_114 = arith.constant 127 : i32
    %258 = tpu.dynamic_rotate %244 by %c127_i32_114 dim 1 : vector<32x128xf32>, i32 -> vector<32x128xf32>
    %259 = vector.broadcast %5 : vector<1x128xf32> to vector<32x128xf32>
    %260 = arith.mulf %258, %259 : vector<32x128xf32>
    %261 = arith.truncf %260 : vector<32x128xf32> to vector<32x128xbf16>
    %c126_i32_115 = arith.constant 126 : i32
    %262 = tpu.dynamic_rotate %244 by %c126_i32_115 dim 1 : vector<32x128xf32>, i32 -> vector<32x128xf32>
    %263 = vector.broadcast %7 : vector<1x128xf32> to vector<32x128xf32>
    %264 = arith.mulf %262, %263 : vector<32x128xf32>
    %265 = arith.truncf %264 : vector<32x128xf32> to vector<32x128xbf16>
    %266 = tpu.concatenate %252, %256, %257, %261, %265 in 0 : vector<32x128xbf16>, vector<32x128xbf16>, vector<32x128xbf16>, vector<32x128xbf16>, vector<32x128xbf16> -> vector<160x128xbf16>
    %cst_116 = arith.constant dense<0.000000e+00> : vector<32x128xf32>
    %267 = tpu.matmul %246, %266, %cst_116 {dimension_numbers = #tpu.dot_dimension_numbers<[1], [0], [0], [1], [0, 0, 1, 1], [], []>} : vector<32x160xbf16>, vector<160x128xbf16>, vector<32x128xf32> -> vector<32x128xf32>
    %268 = vector.broadcast %248 : vector<32x1xf32> to vector<32x128xf32>
    %269 = arith.addf %267, %268 : vector<32x128xf32>
    %cst_117 = arith.constant 0.000000e+00 : f32
    %270 = vector.broadcast %cst_117 : f32 to vector<32x128xf32>
    %271 = arith.maximumf %269, %270 : vector<32x128xf32>
    %c9 = arith.constant 9 : index
    %c0_118 = arith.constant 0 : index
    %c0_119 = arith.constant 0 : index
    %272 = vector.load %arg4[%c9, %c0_118, %c0_119] : memref<10x32x160xbf16, #tpu.memory_space<vmem>>, vector<1x32x160xbf16>
    %273 = vector.shape_cast %272 : vector<1x32x160xbf16> to vector<32x160xbf16>
    %c9_120 = arith.constant 9 : index
    %c0_121 = arith.constant 0 : index
    %c0_122 = arith.constant 0 : index
    %274 = vector.load %arg5[%c9_120, %c0_121, %c0_122] : memref<10x32x1xf32, #tpu.memory_space<vmem>>, vector<1x32x1xf32>
    %275 = vector.shape_cast %274 : vector<1x32x1xf32> to vector<32x1xf32>
    %c2_i32_123 = arith.constant 2 : i32
    %276 = tpu.dynamic_rotate %271 by %c2_i32_123 dim 1 : vector<32x128xf32>, i32 -> vector<32x128xf32>
    %277 = vector.broadcast %1 : vector<1x128xf32> to vector<32x128xf32>
    %278 = arith.mulf %276, %277 : vector<32x128xf32>
    %279 = arith.truncf %278 : vector<32x128xf32> to vector<32x128xbf16>
    %c1_i32_124 = arith.constant 1 : i32
    %280 = tpu.dynamic_rotate %271 by %c1_i32_124 dim 1 : vector<32x128xf32>, i32 -> vector<32x128xf32>
    %281 = vector.broadcast %3 : vector<1x128xf32> to vector<32x128xf32>
    %282 = arith.mulf %280, %281 : vector<32x128xf32>
    %283 = arith.truncf %282 : vector<32x128xf32> to vector<32x128xbf16>
    %284 = arith.truncf %271 : vector<32x128xf32> to vector<32x128xbf16>
    %c127_i32_125 = arith.constant 127 : i32
    %285 = tpu.dynamic_rotate %271 by %c127_i32_125 dim 1 : vector<32x128xf32>, i32 -> vector<32x128xf32>
    %286 = vector.broadcast %5 : vector<1x128xf32> to vector<32x128xf32>
    %287 = arith.mulf %285, %286 : vector<32x128xf32>
    %288 = arith.truncf %287 : vector<32x128xf32> to vector<32x128xbf16>
    %c126_i32_126 = arith.constant 126 : i32
    %289 = tpu.dynamic_rotate %271 by %c126_i32_126 dim 1 : vector<32x128xf32>, i32 -> vector<32x128xf32>
    %290 = vector.broadcast %7 : vector<1x128xf32> to vector<32x128xf32>
    %291 = arith.mulf %289, %290 : vector<32x128xf32>
    %292 = arith.truncf %291 : vector<32x128xf32> to vector<32x128xbf16>
    %293 = tpu.concatenate %279, %283, %284, %288, %292 in 0 : vector<32x128xbf16>, vector<32x128xbf16>, vector<32x128xbf16>, vector<32x128xbf16>, vector<32x128xbf16> -> vector<160x128xbf16>
    %cst_127 = arith.constant dense<0.000000e+00> : vector<32x128xf32>
    %294 = tpu.matmul %273, %293, %cst_127 {dimension_numbers = #tpu.dot_dimension_numbers<[1], [0], [0], [1], [0, 0, 1, 1], [], []>} : vector<32x160xbf16>, vector<160x128xbf16>, vector<32x128xf32> -> vector<32x128xf32>
    %295 = vector.broadcast %275 : vector<32x1xf32> to vector<32x128xf32>
    %296 = arith.addf %294, %295 : vector<32x128xf32>
    %cst_128 = arith.constant 3.000000e-01 : f32
    %297 = vector.broadcast %cst_128 : f32 to vector<32x128xf32>
    %298 = arith.mulf %297, %296 : vector<32x128xf32>
    %299 = arith.addf %242, %298 : vector<32x128xf32>
    %c0_129 = arith.constant 0 : index
    %c0_130 = arith.constant 0 : index
    %300 = vector.load %arg6[%c0_129, %c0_130] : memref<32x128xf32, #tpu.memory_space<vmem>>, vector<32x128xf32>
    %301 = arith.mulf %299, %300 : vector<32x128xf32>
    %cst_131 = arith.constant dense<0.000000e+00> : vector<128xf32>
    %302 = vector.multi_reduction <add>, %301, %cst_131 [0] : vector<32x128xf32> to vector<128xf32>
    %303 = vector.shape_cast %302 : vector<128xf32> to vector<1x128xf32>
    %c1_i32_132 = arith.constant 1 : i32
    %304 = tpu.dynamic_rotate %303 by %c1_i32_132 dim 1 : vector<1x128xf32>, i32 -> vector<1x128xf32>
    %305 = arith.addf %303, %304 : vector<1x128xf32>
    %c2_i32_133 = arith.constant 2 : i32
    %306 = tpu.dynamic_rotate %303 by %c2_i32_133 dim 1 : vector<1x128xf32>, i32 -> vector<1x128xf32>
    %307 = arith.addf %305, %306 : vector<1x128xf32>
    %c3_i32 = arith.constant 3 : i32
    %308 = tpu.dynamic_rotate %303 by %c3_i32 dim 1 : vector<1x128xf32>, i32 -> vector<1x128xf32>
    %309 = arith.addf %307, %308 : vector<1x128xf32>
    %c4_i32 = arith.constant 4 : i32
    %310 = tpu.dynamic_rotate %303 by %c4_i32 dim 1 : vector<1x128xf32>, i32 -> vector<1x128xf32>
    %311 = arith.addf %309, %310 : vector<1x128xf32>
    %c5_i32 = arith.constant 5 : i32
    %312 = tpu.dynamic_rotate %303 by %c5_i32 dim 1 : vector<1x128xf32>, i32 -> vector<1x128xf32>
    %313 = arith.addf %311, %312 : vector<1x128xf32>
    %c6_i32 = arith.constant 6 : i32
    %314 = tpu.dynamic_rotate %303 by %c6_i32 dim 1 : vector<1x128xf32>, i32 -> vector<1x128xf32>
    %315 = arith.addf %313, %314 : vector<1x128xf32>
    %c7_i32 = arith.constant 7 : i32
    %316 = tpu.dynamic_rotate %303 by %c7_i32 dim 1 : vector<1x128xf32>, i32 -> vector<1x128xf32>
    %317 = arith.addf %315, %316 : vector<1x128xf32>
    %c0_134 = arith.constant 0 : index
    %c0_135 = arith.constant 0 : index
    %318 = vector.load %arg7[%c0_134, %c0_135] : memref<1x1xf32, #tpu.memory_space<vmem>>, vector<1x1xf32>
    %319 = vector.broadcast %318 : vector<1x1xf32> to vector<1x128xf32>
    %320 = arith.addf %317, %319 : vector<1x128xf32>
    %cst_136 = arith.constant 0.000000e+00 : f32
    %321 = vector.broadcast %cst_136 : f32 to vector<1x128xf32>
    %322 = arith.subf %321, %320 : vector<1x128xf32>
    %323 = math.exp %322 : vector<1x128xf32>
    %cst_137 = arith.constant 1.000000e+00 : f32
    %324 = vector.broadcast %cst_137 : f32 to vector<1x128xf32>
    %325 = arith.addf %324, %323 : vector<1x128xf32>
    %cst_138 = arith.constant 1.000000e+00 : f32
    %326 = vector.broadcast %cst_138 : f32 to vector<1x128xf32>
    %327 = arith.divf %326, %325 : vector<1x128xf32>
    %c0_139 = arith.constant 0 : index
    %c0_140 = arith.constant 0 : index
    %328 = vector.load %arg9[%c0_139, %c0_140] : memref<1x128xf32, #tpu.memory_space<vmem>>, vector<1x128xf32>
    tpu.vector_store %arg9[%c0_139, %c0_140], %327 {strides = array<i32>} : memref<1x128xf32, #tpu.memory_space<vmem>>, vector<1x128xf32>,
    return
  }
  func.func @transform_0(%arg0: i32) -> (i32, i32) {
    %c0_i32 = arith.constant 0 : i32
    %c0_i32_0 = arith.constant 0 : i32
    return %c0_i32, %arg0 : i32, i32
  }
  func.func @transform_1(%arg0: i32) -> (i32, i32) {
    %c0_i32 = arith.constant 0 : i32
    %c0_i32_0 = arith.constant 0 : i32
    %c0_i32_1 = arith.constant 0 : i32
    return %c0_i32, %c0_i32_0 : i32, i32
  }
  func.func @transform_2(%arg0: i32) -> (i32, i32) {
    %c0_i32 = arith.constant 0 : i32
    %c0_i32_0 = arith.constant 0 : i32
    %c0_i32_1 = arith.constant 0 : i32
    return %c0_i32, %c0_i32_0 : i32, i32
  }
  func.func @transform_3(%arg0: i32) -> (i32, i32, i32) {
    %c0_i32 = arith.constant 0 : i32
    %c0_i32_0 = arith.constant 0 : i32
    %c0_i32_1 = arith.constant 0 : i32
    %c0_i32_2 = arith.constant 0 : i32
    return %c0_i32, %c0_i32_0, %c0_i32_1 : i32, i32, i32
  }
  func.func @transform_4(%arg0: i32) -> (i32, i32, i32) {
    %c0_i32 = arith.constant 0 : i32
    %c0_i32_0 = arith.constant 0 : i32
    %c0_i32_1 = arith.constant 0 : i32
    %c0_i32_2 = arith.constant 0 : i32
    return %c0_i32, %c0_i32_0, %c0_i32_1 : i32, i32, i32
  }
  func.func @transform_5(%arg0: i32) -> (i32, i32) {
    %c0_i32 = arith.constant 0 : i32
    %c0_i32_0 = arith.constant 0 : i32
    %c0_i32_1 = arith.constant 0 : i32
    return %c0_i32, %c0_i32_0 : i32, i32
  }
  func.func @transform_6(%arg0: i32) -> (i32, i32) {
    %c0_i32 = arith.constant 0 : i32
    %c0_i32_0 = arith.constant 0 : i32
    %c0_i32_1 = arith.constant 0 : i32
    return %c0_i32, %c0_i32_0 : i32, i32
  }
  func.func @transform_7(%arg0: i32) -> (i32, i32, i32) {
    %c0_i32 = arith.constant 0 : i32
    %c0_i32_0 = arith.constant 0 : i32
    %c0_i32_1 = arith.constant 0 : i32
    %c0_i32_2 = arith.constant 0 : i32
    return %c0_i32, %c0_i32_0, %c0_i32_1 : i32, i32, i32
  }
  func.func @transform_8(%arg0: i32) -> (i32, i32) {
    %c0_i32 = arith.constant 0 : i32
    %c0_i32_0 = arith.constant 0 : i32
    return %c0_i32, %arg0 : i32, i32
  }
}

</mosaic_0001>

<llo_original>
// kernel: tpu_custom_call.1
$region0: #{tpu_custom_call.1}
  #allocation0 [shape = 'u32[]', space=smem, size = 0x4, offset = 0x4, fixed_abs, tag = 'smem constant byte address 0x4 - core index']
  #allocation1 [shape = 'u32[144,128]{1,0:T(1,128)}', space=vmem, size = 0x12000, scoped, tag = 'internal scratch']
  #allocation2 [shape = 'f32[1,1]{1,0:T(1,128)S(1)}', space=vmem, size = 0x200, scoped, tag = 'scoped memory for tpu_custom_call.1']
  %s0 = inlined_call_operand.vmem [shape: f32[4,128], index: 0, kind: input, shape index: {}]
  %s1 = inlined_call_operand.vmem [shape: bf16[32,4], index: 1, kind: input, shape index: {}]
  %s2 = inlined_call_operand.vmem [shape: f32[32,1], index: 2, kind: input, shape index: {}]
  %s3 = inlined_call_operand.vmem [shape: bf16[10,32,160], index: 3, kind: input, shape index: {}]
  %s4 = inlined_call_operand.vmem [shape: f32[10,32,1], index: 4, kind: input, shape index: {}]
  %s5 = inlined_call_operand.vmem [shape: f32[32,128], index: 5, kind: input, shape index: {}]
  %s6 = inlined_call_operand.<no memory space> [shape: f32[1,1], index: 6, kind: input, shape index: {}]
  %s7 = inlined_call_operand.vmem [shape: f32[4,1,128], index: 7, kind: input, shape index: {}]
  %s8 = inlined_call_operand.hbm [shape: f32[1,128], index: 8, kind: output, shape index: {}]
  %s9 = sld [smem:[#allocation0]]
  $region42: #{tpu_custom_call.1} parent=0
    _
  %s11 = ssub.s32 1, %s9
  %s12 = scalar_select 0, %s11, %s9
  %v13 = vstv %s6
  %14 = vst [vmem:[#allocation2] sm:$0x1] %v13
  $region1: #{tpu_custom_call.1} parent=0
    #allocation3 [shape = 'u8[512]{0}', space=vmem, size = 0x400, scoped, tag = 'output window, operand 0, single buffered']
    #allocation4 [shape = 's32[1]{0}', space=sflag, size = 0x4, scoped, tag = 'scoped memory for tpu_custom_call.1']
    %15 = vsyncpa [#allocation4], 0
    // Predicated region
    $region2: #{tpu_custom_call.1} parent=1 // pred_check
      _
    $region3: #{tpu_custom_call.1} parent=1 // pred_check_branch
      %17 = sbr.rel (0) target = $region5
    $region4: #{tpu_custom_call.1} parent=1 // pred_region
      _
    $region5: #{tpu_custom_call.1} parent=1 // pred_fallthru
      _
    // Predicated region
    $region6: #{tpu_custom_call.1} parent=1 // pred_check
      _
    $region7: #{tpu_custom_call.1} parent=1 // pred_check_branch
      %19 = sbr.rel (0) target = $region9
    $region8: #{tpu_custom_call.1} parent=1 // pred_region
      _
    $region9: #{tpu_custom_call.1} parent=1 // pred_fallthru
      _
    // Predicated region
    $region10: #{tpu_custom_call.1} parent=1 // pred_check
      _
    $region11: #{tpu_custom_call.1} parent=1 // pred_check_branch
      %21 = sbr.rel (0) target = $region13
    $region12: #{tpu_custom_call.1} parent=1 // pred_region
      _
    $region13: #{tpu_custom_call.1} parent=1 // pred_fallthru
      _
    // Predicated region
    $region14: #{tpu_custom_call.1} parent=1 // pred_check
      _
    $region15: #{tpu_custom_call.1} parent=1 // pred_check_branch
      %23 = sbr.rel (0) target = $region17
    $region16: #{tpu_custom_call.1} parent=1 // pred_region
      _
    $region17: #{tpu_custom_call.1} parent=1 // pred_fallthru
      _
    // Predicated region
    $region18: #{tpu_custom_call.1} parent=1 // pred_check
      _
    $region19: #{tpu_custom_call.1} parent=1 // pred_check_branch
      %25 = sbr.rel (0) target = $region21
    $region20: #{tpu_custom_call.1} parent=1 // pred_region
      _
    $region21: #{tpu_custom_call.1} parent=1 // pred_fallthru
      _
    // Predicated region
    $region22: #{tpu_custom_call.1} parent=1 // pred_check
      _
    $region23: #{tpu_custom_call.1} parent=1 // pred_check_branch
      %27 = sbr.rel (0) target = $region25
    $region24: #{tpu_custom_call.1} parent=1 // pred_region
      _
    $region25: #{tpu_custom_call.1} parent=1 // pred_fallthru
      _
    // Predicated region
    $region26: #{tpu_custom_call.1} parent=1 // pred_check
      _
    $region27: #{tpu_custom_call.1} parent=1 // pred_check_branch
      %29 = sbr.rel (0) target = $region29
    $region28: #{tpu_custom_call.1} parent=1 // pred_region
      _
    $region29: #{tpu_custom_call.1} parent=1 // pred_fallthru
      _
    // Predicated region
    $region30: #{tpu_custom_call.1} parent=1 // pred_check
      _
    $region31: #{tpu_custom_call.1} parent=1 // pred_check_branch
      %31 = sbr.rel (0) target = $region33
    $region32: #{tpu_custom_call.1} parent=1 // pred_region
      _
    $region33: #{tpu_custom_call.1} parent=1 // pred_fallthru
      _
    %v33 = vld [vmem:[%s7] sm:$0x1]
    %s34 = scalar_lea.vmem %s7, 1
    %v35 = vld [vmem:[%s34] sm:$0x1]
    %s36 = scalar_lea.vmem %s7, 2
    %v37 = vld [vmem:[%s36] sm:$0x1]
    %s38 = scalar_lea.vmem %s7, 3
    %v39 = vld [vmem:[%s38] sm:$0x1]
    %v40 = vld [vmem:[%s0] sm:$0xf]
    %v41 = vpack.c.bf16 %v40, %v40
    %v42 = vld [vmem:[%s1] sm:$0xf]
    %v43 = vld [vmem:[%s1 + $0x4] sm:$0xf]
    %v44 = vld [vmem:[%s1 + $0x8] sm:$0xf]
    %v45 = vld [vmem:[%s1 + $0xc] sm:$0xf]
    %v46 = vld [vmem:[%s2] sm:$0xff]
    %v47 = vld [vmem:[%s2 + $0x8] sm:$0xff]
    %v48 = vld [vmem:[%s2 + $0x10] sm:$0xff]
    %v49 = vld [vmem:[%s2 + $0x18] sm:$0xff]
    %51 = vset.pattern.permute.xlu0 0
    %52 = vperm.xlu0 %51, %v46
    %v53 = vpop.permute.xlu0 %52
    %56 = vset.pattern.permute.xlu0 0
    %57 = vperm.xlu0 %56, %v47
    %v58 = vpop.permute.xlu0 %57
    %61 = vset.pattern.permute.xlu0 0
    %62 = vperm.xlu0 %61, %v48
    %v63 = vpop.permute.xlu0 %62
    %66 = vset.pattern.permute.xlu0 0
    %67 = vperm.xlu0 %66, %v49
    %v68 = vpop.permute.xlu0 %67
    %v74 = vunpack.c.l.b16 %v42
    %v75 = vunpack.c.l.b16 %v43
    %v76 = vunpack.c.l.b16 %v44
    %v77 = vunpack.c.l.b16 %v45
    %v78 = vpack.c.b16 %v75, %v74
    %v79 = vpack.c.b16 %v77, %v76
    %vm80 = vcmask 31744
    %v82 = vsel %vm80, %v78, 0
    %v85 = vsel %vm80, %v79, 0
    %vm87 = vcmask 1041408
    %v89 = vsel %vm87, %v41, 0
    %91 = vmatprep.subr.bf16.mxu0 0
    %92 = vmatpush1.bf16.msra.mxu0 0
    %93 = vmatprep.subr.bf16.mxu0 0
    %94 = vmatpush1.bf16.msra.mxu0 0
    %95 = vmatprep.subr.bf16.mxu0 0
    %96 = vmatpush1.bf16.msra.mxu0 0
    %97 = vmatprep.subr.bf16.mxu0 0
    %98 = vmatpush1.bf16.msra.mxu0 0
    %99 = vmatprep.subr.bf16.mxu0 0
    %100 = vmatpush1.bf16.msra.mxu0 0
    %101 = vmatprep.subr.bf16.mxu0 0
    %102 = vmatpush1.bf16.msra.mxu0 0
    %103 = vmatprep.subr.bf16.mxu0 0
    %104 = vmatpush1.bf16.msra.mxu0 0
    %105 = vmatprep.subr.bf16.mxu0 0
    %106 = vmatpush1.bf16.msra.mxu0 %v89
    %107 = vmatprep.subr.bf16.mxu0 0
    %108 = vmatpush2.bf16.msra.mxu0 0
    %109 = vmatprep.subr.bf16.mxu0 0
    %110 = vmatpush2.bf16.msra.mxu0 0
    %111 = vmatprep.subr.bf16.mxu0 0
    %112 = vmatpush2.bf16.msra.mxu0 0
    %113 = vmatprep.subr.bf16.mxu0 0
    %114 = vmatpush2.bf16.msra.mxu0 0
    %115 = vmatprep.subr.bf16.mxu0 0
    %116 = vmatpush2.bf16.msra.mxu0 0
    %117 = vmatprep.subr.bf16.mxu0 0
    %118 = vmatpush2.bf16.msra.mxu0 0
    %119 = vmatprep.subr.bf16.mxu0 0
    %120 = vmatpush2.bf16.msra.mxu0 0
    %121 = vmatprep.subr.bf16.mxu0 0
    %122 = vmatpush2.bf16.msra.mxu0 0
    %123 = vmatprep.mubr.bf16.mxu0 0
    %124 = vmatmul.mubr.bf16.gmra.mxu0 %v82
    %v125 = vpop.f32.mrf.mxu0
    %v126 = vadd.f32 %v53, %v125
    %v127 = vpop.f32.mrf.mxu0
    %v128 = vpop.f32.mrf.mxu0
    %v129 = vadd.f32 %v58, %v128
    %v130 = vpop.f32.mrf.mxu0
    %131 = vmatprep.mubr.bf16.mxu0 0
    %132 = vmatmul.mubr.bf16.gmra.mxu0 %v85
    %v133 = vpop.f32.mrf.mxu0
    %v134 = vadd.f32 %v63, %v133
    %v135 = vpop.f32.mrf.mxu0
    %v136 = vpop.f32.mrf.mxu0
    %v137 = vadd.f32 %v68, %v136
    %v138 = vpop.f32.mrf.mxu0
    %139 = vdwg.mxu0
    %v140 = vmax.f32 %v126, 0.0
    %v141 = vmax.f32 %v129, 0.0
    %v142 = vmax.f32 %v134, 0.0
    %v143 = vmax.f32 %v137, 0.0
    %v144 = vld [vmem:[%s3] sm:$0xff]
    %v145 = vld [vmem:[%s3 + $0x8] sm:$0xff]
    %v146 = vld [vmem:[%s3 + $0x10] sm:$0xff]
    %v147 = vld [vmem:[%s3 + $0x18] sm:$0xff]
    %v148 = vld [vmem:[%s4] sm:$0xff]
    %v149 = vld [vmem:[%s4 + $0x8] sm:$0xff]
    %v150 = vld [vmem:[%s4 + $0x10] sm:$0xff]
    %v151 = vld [vmem:[%s4 + $0x18] sm:$0xff]
    %152 = vrot.lane.b32.xlu0 %v140, 2
    %v153 = vpop.permute.xlu0 %152
    %154 = vrot.lane.b32.xlu0 %v141, 2
    %v155 = vpop.permute.xlu0 %154
    %156 = vrot.lane.b32.xlu0 %v142, 2
    %v157 = vpop.permute.xlu0 %156
    %158 = vrot.lane.b32.xlu0 %v143, 2
    %v159 = vpop.permute.xlu0 %158
    %v161 = vlaneseq
    %v162 = vshrl.u32 %v161, 7
    %v163 = vsub.s32 0, %v162
    %v164 = vrot.slane %v33, %v163
    %v166 = vmul.f32 %v153, %v164
    %v167 = vmul.f32 %v155, %v164
    %v168 = vmul.f32 %v157, %v164
    %v169 = vmul.f32 %v159, %v164
    %v170 = vpack.c.bf16 %v167, %v166
    %v171 = vpack.c.bf16 %v169, %v168
    %172 = vrot.lane.b32.xlu0 %v140, 1
    %v173 = vpop.permute.xlu0 %172
    %174 = vrot.lane.b32.xlu0 %v141, 1
    %v175 = vpop.permute.xlu0 %174
    %176 = vrot.lane.b32.xlu0 %v142, 1
    %v177 = vpop.permute.xlu0 %176
    %178 = vrot.lane.b32.xlu0 %v143, 1
    %v179 = vpop.permute.xlu0 %178
    %v181 = vlaneseq
    %v182 = vshrl.u32 %v181, 7
    %v183 = vsub.s32 0, %v182
    %v184 = vrot.slane %v35, %v183
    %v186 = vmul.f32 %v173, %v184
    %v187 = vmul.f32 %v175, %v184
    %v188 = vmul.f32 %v177, %v184
    %v189 = vmul.f32 %v179, %v184
    %v190 = vpack.c.bf16 %v187, %v186
    %v191 = vpack.c.bf16 %v189, %v188
    %v192 = vpack.c.bf16 %v141, %v140
    %v193 = vpack.c.bf16 %v143, %v142
    %194 = vrot.lane.b32.xlu0 %v140, 127
    %v195 = vpop.permute.xlu0 %194
    %196 = vrot.lane.b32.xlu0 %v141, 127
    %v197 = vpop.permute.xlu0 %196
    %198 = vrot.lane.b32.xlu0 %v142, 127
    %v199 = vpop.permute.xlu0 %198
    %200 = vrot.lane.b32.xlu0 %v143, 127
    %v201 = vpop.permute.xlu0 %200
    %v203 = vlaneseq
    %v204 = vshrl.u32 %v203, 7
    %v205 = vsub.s32 0, %v204
    %v206 = vrot.slane %v37, %v205
    %v208 = vmul.f32 %v195, %v206
    %v209 = vmul.f32 %v197, %v206
    %v210 = vmul.f32 %v199, %v206
    %v211 = vmul.f32 %v201, %v206
    %v212 = vpack.c.bf16 %v209, %v208
    %v213 = vpack.c.bf16 %v211, %v210
    %214 = vrot.lane.b32.xlu0 %v140, 126
    %v215 = vpop.permute.xlu0 %214
    %216 = vrot.lane.b32.xlu0 %v141, 126
    %v217 = vpop.permute.xlu0 %216
    %218 = vrot.lane.b32.xlu0 %v142, 126
    %v219 = vpop.permute.xlu0 %218
    %220 = vrot.lane.b32.xlu0 %v143, 126
    %v221 = vpop.permute.xlu0 %220
    %v223 = vlaneseq
    %v224 = vshrl.u32 %v223, 7
    %v225 = vsub.s32 0, %v224
    %v226 = vrot.slane %v39, %v225
    %v228 = vmul.f32 %v215, %v226
    %v229 = vmul.f32 %v217, %v226
    %v230 = vmul.f32 %v219, %v226
    %v231 = vmul.f32 %v221, %v226
    %v232 = vpack.c.bf16 %v229, %v228
    %v233 = vpack.c.bf16 %v231, %v230
    %235 = vset.pattern.permute.xlu0 0
    %236 = vperm.xlu0 %235, %v148
    %v237 = vpop.permute.xlu0 %236
    %240 = vset.pattern.permute.xlu0 0
    %241 = vperm.xlu0 %240, %v149
    %v242 = vpop.permute.xlu0 %241
    %245 = vset.pattern.permute.xlu0 0
    %246 = vperm.xlu0 %245, %v150
    %v247 = vpop.permute.xlu0 %246
    %250 = vset.pattern.permute.xlu0 0
    %251 = vperm.xlu0 %250, %v151
    %v252 = vpop.permute.xlu0 %251
    %v258 = vunpack.c.l.b16 %v144
    %v259 = vunpack.c.h.b16 %v144
    %v260 = vunpack.c.l.b16 %v145
    %v261 = vunpack.c.h.b16 %v145
    %v262 = vunpack.c.l.b16 %v146
    %v263 = vunpack.c.h.b16 %v146
    %v264 = vunpack.c.l.b16 %v147
    %v265 = vunpack.c.h.b16 %v147
    %v266 = vpack.c.b16 %v260, %v258
    %v267 = vpack.c.b16 %v261, %v259
    %v268 = vpack.c.b16 %v264, %v262
    %v269 = vpack.c.b16 %v265, %v263
    %vm272 = vcmask 261120
    %v274 = vsel %vm272, %v267, 0
    %v277 = vsel %vm272, %v269, 0
    %279 = vmatprep.subr.bf16.mxu0 0
    %280 = vmatpush1.bf16.msra.mxu0 %v213
    %281 = vmatprep.subr.bf16.mxu0 0
    %282 = vmatpush1.bf16.msra.mxu0 %v212
    %283 = vmatprep.subr.bf16.mxu0 0
    %284 = vmatpush1.bf16.msra.mxu0 %v193
    %285 = vmatprep.subr.bf16.mxu0 0
    %286 = vmatpush1.bf16.msra.mxu0 %v192
    %287 = vmatprep.subr.bf16.mxu0 0
    %288 = vmatpush1.bf16.msra.mxu0 %v191
    %289 = vmatprep.subr.bf16.mxu0 0
    %290 = vmatpush1.bf16.msra.mxu0 %v190
    %291 = vmatprep.subr.bf16.mxu0 0
    %292 = vmatpush1.bf16.msra.mxu0 %v171
    %293 = vmatprep.subr.bf16.mxu0 0
    %294 = vmatpush1.bf16.msra.mxu0 %v170
    %295 = vmatprep.subr.bf16.mxu0 0
    %296 = vmatpush2.bf16.msra.mxu0 0
    %297 = vmatprep.subr.bf16.mxu0 0
    %298 = vmatpush2.bf16.msra.mxu0 0
    %299 = vmatprep.subr.bf16.mxu0 0
    %300 = vmatpush2.bf16.msra.mxu0 0
    %301 = vmatprep.subr.bf16.mxu0 0
    %302 = vmatpush2.bf16.msra.mxu0 0
    %303 = vmatprep.subr.bf16.mxu0 0
    %304 = vmatpush2.bf16.msra.mxu0 0
    %305 = vmatprep.subr.bf16.mxu0 0
    %306 = vmatpush2.bf16.msra.mxu0 0
    %307 = vmatprep.subr.bf16.mxu0 0
    %308 = vmatpush2.bf16.msra.mxu0 %v233
    %309 = vmatprep.subr.bf16.mxu0 0
    %310 = vmatpush2.bf16.msra.mxu0 %v232
    %311 = vmatprep.mubr.bf16.mxu0 %v274
    %312 = vmatmul.mubr.bf16.gmra.mxu0 %v266
    %v313 = vpop.f32.mrf.mxu0
    %v314 = vadd.f32 %v237, %v313
    %v315 = vpop.f32.mrf.mxu0
    %v316 = vpop.f32.mrf.mxu0
    %v317 = vadd.f32 %v242, %v316
    %v318 = vpop.f32.mrf.mxu0
    %319 = vmatprep.mubr.bf16.mxu0 %v277
    %320 = vmatmul.mubr.bf16.gmra.mxu0 %v268
    %v321 = vpop.f32.mrf.mxu0
    %v322 = vadd.f32 %v247, %v321
    %v323 = vpop.f32.mrf.mxu0
    %v324 = vpop.f32.mrf.mxu0
    %v325 = vadd.f32 %v252, %v324
    %v326 = vpop.f32.mrf.mxu0
    %327 = vdwg.mxu0
    %v328 = vmax.f32 %v314, 0.0
    %v329 = vmax.f32 %v317, 0.0
    %v330 = vmax.f32 %v322, 0.0
    %v331 = vmax.f32 %v325, 0.0
    %s332 = scalar_lea.vmem %s3, 32
    %v333 = vld [vmem:[%s332] sm:$0xff]
    %v334 = vld [vmem:[%s332 + $0x8] sm:$0xff]
    %v335 = vld [vmem:[%s332 + $0x10] sm:$0xff]
    %v336 = vld [vmem:[%s332 + $0x18] sm:$0xff]
    %s337 = scalar_lea.vmem %s4, 32
    %v338 = vld [vmem:[%s337] sm:$0xff]
    %v339 = vld [vmem:[%s337 + $0x8] sm:$0xff]
    %v340 = vld [vmem:[%s337 + $0x10] sm:$0xff]
    %v341 = vld [vmem:[%s337 + $0x18] sm:$0xff]
    %342 = vrot.lane.b32.xlu0 %v328, 2
    %v343 = vpop.permute.xlu0 %342
    %344 = vrot.lane.b32.xlu0 %v329, 2
    %v345 = vpop.permute.xlu0 %344
    %346 = vrot.lane.b32.xlu0 %v330, 2
    %v347 = vpop.permute.xlu0 %346
    %348 = vrot.lane.b32.xlu0 %v331, 2
    %v349 = vpop.permute.xlu0 %348
    %v350 = vmul.f32 %v343, %v164
    %v351 = vmul.f32 %v345, %v164
    %v352 = vmul.f32 %v347, %v164
    %v353 = vmul.f32 %v349, %v164
    %v354 = vpack.c.bf16 %v351, %v350
    %v355 = vpack.c.bf16 %v353, %v352
    %356 = vrot.lane.b32.xlu0 %v328, 1
    %v357 = vpop.permute.xlu0 %356
    %358 = vrot.lane.b32.xlu0 %v329, 1
    %v359 = vpop.permute.xlu0 %358
    %360 = vrot.lane.b32.xlu0 %v330, 1
    %v361 = vpop.permute.xlu0 %360
    %362 = vrot.lane.b32.xlu0 %v331, 1
    %v363 = vpop.permute.xlu0 %362
    %v364 = vmul.f32 %v357, %v184
    %v365 = vmul.f32 %v359, %v184
    %v366 = vmul.f32 %v361, %v184
    %v367 = vmul.f32 %v363, %v184
    %v368 = vpack.c.bf16 %v365, %v364
    %v369 = vpack.c.bf16 %v367, %v366
    %v370 = vpack.c.bf16 %v329, %v328
    %v371 = vpack.c.bf16 %v331, %v330
    %372 = vrot.lane.b32.xlu0 %v328, 127
    %v373 = vpop.permute.xlu0 %372
    %374 = vrot.lane.b32.xlu0 %v329, 127
    %v375 = vpop.permute.xlu0 %374
    %376 = vrot.lane.b32.xlu0 %v330, 127
    %v377 = vpop.permute.xlu0 %376
    %378 = vrot.lane.b32.xlu0 %v331, 127
    %v379 = vpop.permute.xlu0 %378
    %v380 = vmul.f32 %v373, %v206
    %v381 = vmul.f32 %v375, %v206
    %v382 = vmul.f32 %v377, %v206
    %v383 = vmul.f32 %v379, %v206
    %v384 = vpack.c.bf16 %v381, %v380
    %v385 = vpack.c.bf16 %v383, %v382
    %386 = vrot.lane.b32.xlu0 %v328, 126
    %v387 = vpop.permute.xlu0 %386
    %388 = vrot.lane.b32.xlu0 %v329, 126
    %v389 = vpop.permute.xlu0 %388
    %390 = vrot.lane.b32.xlu0 %v330, 126
    %v391 = vpop.permute.xlu0 %390
    %392 = vrot.lane.b32.xlu0 %v331, 126
    %v393 = vpop.permute.xlu0 %392
    %v394 = vmul.f32 %v387, %v226
    %v395 = vmul.f32 %v389, %v226
    %v396 = vmul.f32 %v391, %v226
    %v397 = vmul.f32 %v393, %v226
    %v398 = vpack.c.bf16 %v395, %v394
    %v399 = vpack.c.bf16 %v397, %v396
    %401 = vset.pattern.permute.xlu0 0
    %402 = vperm.xlu0 %401, %v338
    %v403 = vpop.permute.xlu0 %402
    %406 = vset.pattern.permute.xlu0 0
    %407 = vperm.xlu0 %406, %v339
    %v408 = vpop.permute.xlu0 %407
    %411 = vset.pattern.permute.xlu0 0
    %412 = vperm.xlu0 %411, %v340
    %v413 = vpop.permute.xlu0 %412
    %416 = vset.pattern.permute.xlu0 0
    %417 = vperm.xlu0 %416, %v341
    %v418 = vpop.permute.xlu0 %417
    %v424 = vunpack.c.l.b16 %v333
    %v425 = vunpack.c.h.b16 %v333
    %v426 = vunpack.c.l.b16 %v334
    %v427 = vunpack.c.h.b16 %v334
    %v428 = vunpack.c.l.b16 %v335
    %v429 = vunpack.c.h.b16 %v335
    %v430 = vunpack.c.l.b16 %v336
    %v431 = vunpack.c.h.b16 %v336
    %v432 = vpack.c.b16 %v426, %v424
    %v433 = vpack.c.b16 %v427, %v425
    %v434 = vpack.c.b16 %v430, %v428
    %v435 = vpack.c.b16 %v431, %v429
    %v439 = vsel %vm272, %v433, 0
    %v442 = vsel %vm272, %v435, 0
    %444 = vmatprep.subr.bf16.mxu0 0
    %445 = vmatpush1.bf16.msra.mxu0 %v385
    %446 = vmatprep.subr.bf16.mxu0 0
    %447 = vmatpush1.bf16.msra.mxu0 %v384
    %448 = vmatprep.subr.bf16.mxu0 0
    %449 = vmatpush1.bf16.msra.mxu0 %v371
    %450 = vmatprep.subr.bf16.mxu0 0
    %451 = vmatpush1.bf16.msra.mxu0 %v370
    %452 = vmatprep.subr.bf16.mxu0 0
    %453 = vmatpush1.bf16.msra.mxu0 %v369
    %454 = vmatprep.subr.bf16.mxu0 0
    %455 = vmatpush1.bf16.msra.mxu0 %v368
    %456 = vmatprep.subr.bf16.mxu0 0
    %457 = vmatpush1.bf16.msra.mxu0 %v355
    %458 = vmatprep.subr.bf16.mxu0 0
    %459 = vmatpush1.bf16.msra.mxu0 %v354
    %460 = vmatprep.subr.bf16.mxu0 0
    %461 = vmatpush2.bf16.msra.mxu0 0
    %462 = vmatprep.subr.bf16.mxu0 0
    %463 = vmatpush2.bf16.msra.mxu0 0
    %464 = vmatprep.subr.bf16.mxu0 0
    %465 = vmatpush2.bf16.msra.mxu0 0
    %466 = vmatprep.subr.bf16.mxu0 0
    %467 = vmatpush2.bf16.msra.mxu0 0
    %468 = vmatprep.subr.bf16.mxu0 0
    %469 = vmatpush2.bf16.msra.mxu0 0
    %470 = vmatprep.subr.bf16.mxu0 0
    %471 = vmatpush2.bf16.msra.mxu0 0
    %472 = vmatprep.subr.bf16.mxu0 0
    %473 = vmatpush2.bf16.msra.mxu0 %v399
    %474 = vmatprep.subr.bf16.mxu0 0
    %475 = vmatpush2.bf16.msra.mxu0 %v398
    %476 = vmatprep.mubr.bf16.mxu0 %v439
    %477 = vmatmul.mubr.bf16.gmra.mxu0 %v432
    %v478 = vpop.f32.mrf.mxu0
    %v479 = vadd.f32 %v403, %v478
    %v480 = vpop.f32.mrf.mxu0
    %v481 = vpop.f32.mrf.mxu0
    %v482 = vadd.f32 %v408, %v481
    %v483 = vpop.f32.mrf.mxu0
    %484 = vmatprep.mubr.bf16.mxu0 %v442
    %485 = vmatmul.mubr.bf16.gmra.mxu0 %v434
    %v486 = vpop.f32.mrf.mxu0
    %v487 = vadd.f32 %v413, %v486
    %v488 = vpop.f32.mrf.mxu0
    %v489 = vpop.f32.mrf.mxu0
    %v490 = vadd.f32 %v418, %v489
    %v491 = vpop.f32.mrf.mxu0
    %492 = vdwg.mxu0
    %v493 = vmul.f32 %v479, 0.3
    %v494 = vmul.f32 %v482, 0.3
    %v495 = vmul.f32 %v487, 0.3
    %v496 = vmul.f32 %v490, 0.3
    %v497 = vadd.f32 %v126, %v493
    %v498 = vadd.f32 %v129, %v494
    %v499 = vadd.f32 %v134, %v495
    %v500 = vadd.f32 %v137, %v496
    %v501 = vmax.f32 %v497, 0.0
    %v502 = vmax.f32 %v498, 0.0
    %v503 = vmax.f32 %v499, 0.0
    %v504 = vmax.f32 %v500, 0.0
    %s505 = scalar_lea.vmem %s3, 64
    %v506 = vld [vmem:[%s505] sm:$0xff]
    %v507 = vld [vmem:[%s505 + $0x8] sm:$0xff]
    %v508 = vld [vmem:[%s505 + $0x10] sm:$0xff]
    %v509 = vld [vmem:[%s505 + $0x18] sm:$0xff]
    %s510 = scalar_lea.vmem %s4, 64
    %v511 = vld [vmem:[%s510] sm:$0xff]
    %v512 = vld [vmem:[%s510 + $0x8] sm:$0xff]
    %v513 = vld [vmem:[%s510 + $0x10] sm:$0xff]
    %v514 = vld [vmem:[%s510 + $0x18] sm:$0xff]
    %515 = vrot.lane.b32.xlu0 %v501, 2
    %v516 = vpop.permute.xlu0 %515
    %517 = vrot.lane.b32.xlu0 %v502, 2
    %v518 = vpop.permute.xlu0 %517
    %519 = vrot.lane.b32.xlu0 %v503, 2
    %v520 = vpop.permute.xlu0 %519
    %521 = vrot.lane.b32.xlu0 %v504, 2
    %v522 = vpop.permute.xlu0 %521
    %v523 = vmul.f32 %v516, %v164
    %v524 = vmul.f32 %v518, %v164
    %v525 = vmul.f32 %v520, %v164
    %v526 = vmul.f32 %v522, %v164
    %v527 = vpack.c.bf16 %v524, %v523
    %v528 = vpack.c.bf16 %v526, %v525
    %529 = vrot.lane.b32.xlu0 %v501, 1
    %v530 = vpop.permute.xlu0 %529
    %531 = vrot.lane.b32.xlu0 %v502, 1
    %v532 = vpop.permute.xlu0 %531
    %533 = vrot.lane.b32.xlu0 %v503, 1
    %v534 = vpop.permute.xlu0 %533
    %535 = vrot.lane.b32.xlu0 %v504, 1
    %v536 = vpop.permute.xlu0 %535
    %v537 = vmul.f32 %v530, %v184
    %v538 = vmul.f32 %v532, %v184
    %v539 = vmul.f32 %v534, %v184
    %v540 = vmul.f32 %v536, %v184
    %v541 = vpack.c.bf16 %v538, %v537
    %v542 = vpack.c.bf16 %v540, %v539
    %v543 = vpack.c.bf16 %v502, %v501
    %v544 = vpack.c.bf16 %v504, %v503
    %545 = vrot.lane.b32.xlu0 %v501, 127
    %v546 = vpop.permute.xlu0 %545
    %547 = vrot.lane.b32.xlu0 %v502, 127
    %v548 = vpop.permute.xlu0 %547
    %549 = vrot.lane.b32.xlu0 %v503, 127
    %v550 = vpop.permute.xlu0 %549
    %551 = vrot.lane.b32.xlu0 %v504, 127
    %v552 = vpop.permute.xlu0 %551
    %v553 = vmul.f32 %v546, %v206
    %v554 = vmul.f32 %v548, %v206
    %v555 = vmul.f32 %v550, %v206
    %v556 = vmul.f32 %v552, %v206
    %v557 = vpack.c.bf16 %v554, %v553
    %v558 = vpack.c.bf16 %v556, %v555
    %559 = vrot.lane.b32.xlu0 %v501, 126
    %v560 = vpop.permute.xlu0 %559
    %561 = vrot.lane.b32.xlu0 %v502, 126
    %v562 = vpop.permute.xlu0 %561
    %563 = vrot.lane.b32.xlu0 %v503, 126
    %v564 = vpop.permute.xlu0 %563
    %565 = vrot.lane.b32.xlu0 %v504, 126
    %v566 = vpop.permute.xlu0 %565
    %v567 = vmul.f32 %v560, %v226
    %v568 = vmul.f32 %v562, %v226
    %v569 = vmul.f32 %v564, %v226
    %v570 = vmul.f32 %v566, %v226
    %v571 = vpack.c.bf16 %v568, %v567
    %v572 = vpack.c.bf16 %v570, %v569
    %574 = vset.pattern.permute.xlu0 0
    %575 = vperm.xlu0 %574, %v511
    %v576 = vpop.permute.xlu0 %575
    %579 = vset.pattern.permute.xlu0 0
    %580 = vperm.xlu0 %579, %v512
    %v581 = vpop.permute.xlu0 %580
    %584 = vset.pattern.permute.xlu0 0
    %585 = vperm.xlu0 %584, %v513
    %v586 = vpop.permute.xlu0 %585
    %589 = vset.pattern.permute.xlu0 0
    %590 = vperm.xlu0 %589, %v514
    %v591 = vpop.permute.xlu0 %590
    %v597 = vunpack.c.l.b16 %v506
    %v598 = vunpack.c.h.b16 %v506
    %v599 = vunpack.c.l.b16 %v507
    %v600 = vunpack.c.h.b16 %v507
    %v601 = vunpack.c.l.b16 %v508
    %v602 = vunpack.c.h.b16 %v508
    %v603 = vunpack.c.l.b16 %v509
    %v604 = vunpack.c.h.b16 %v509
    %v605 = vpack.c.b16 %v599, %v597
    %v606 = vpack.c.b16 %v600, %v598
    %v607 = vpack.c.b16 %v603, %v601
    %v608 = vpack.c.b16 %v604, %v602
    %v612 = vsel %vm272, %v606, 0
    %v615 = vsel %vm272, %v608, 0
    %617 = vmatprep.subr.bf16.mxu0 0
    %618 = vmatpush1.bf16.msra.mxu0 %v558
    %619 = vmatprep.subr.bf16.mxu0 0
    %620 = vmatpush1.bf16.msra.mxu0 %v557
    %621 = vmatprep.subr.bf16.mxu0 0
    %622 = vmatpush1.bf16.msra.mxu0 %v544
    %623 = vmatprep.subr.bf16.mxu0 0
    %624 = vmatpush1.bf16.msra.mxu0 %v543
    %625 = vmatprep.subr.bf16.mxu0 0
    %626 = vmatpush1.bf16.msra.mxu0 %v542
    %627 = vmatprep.subr.bf16.mxu0 0
    %628 = vmatpush1.bf16.msra.mxu0 %v541
    %629 = vmatprep.subr.bf16.mxu0 0
    %630 = vmatpush1.bf16.msra.mxu0 %v528
    %631 = vmatprep.subr.bf16.mxu0 0
    %632 = vmatpush1.bf16.msra.mxu0 %v527
    %633 = vmatprep.subr.bf16.mxu0 0
    %634 = vmatpush2.bf16.msra.mxu0 0
    %635 = vmatprep.subr.bf16.mxu0 0
    %636 = vmatpush2.bf16.msra.mxu0 0
    %637 = vmatprep.subr.bf16.mxu0 0
    %638 = vmatpush2.bf16.msra.mxu0 0
    %639 = vmatprep.subr.bf16.mxu0 0
    %640 = vmatpush2.bf16.msra.mxu0 0
    %641 = vmatprep.subr.bf16.mxu0 0
    %642 = vmatpush2.bf16.msra.mxu0 0
    %643 = vmatprep.subr.bf16.mxu0 0
    %644 = vmatpush2.bf16.msra.mxu0 0
    %645 = vmatprep.subr.bf16.mxu0 0
    %646 = vmatpush2.bf16.msra.mxu0 %v572
    %647 = vmatprep.subr.bf16.mxu0 0
    %648 = vmatpush2.bf16.msra.mxu0 %v571
    %649 = vmatprep.mubr.bf16.mxu0 %v612
    %650 = vmatmul.mubr.bf16.gmra.mxu0 %v605
    %v651 = vpop.f32.mrf.mxu0
    %v652 = vadd.f32 %v576, %v651
    %v653 = vpop.f32.mrf.mxu0
    %v654 = vpop.f32.mrf.mxu0
    %v655 = vadd.f32 %v581, %v654
    %v656 = vpop.f32.mrf.mxu0
    %657 = vmatprep.mubr.bf16.mxu0 %v615
    %658 = vmatmul.mubr.bf16.gmra.mxu0 %v607
    %v659 = vpop.f32.mrf.mxu0
    %v660 = vadd.f32 %v586, %v659
    %v661 = vpop.f32.mrf.mxu0
    %v662 = vpop.f32.mrf.mxu0
    %v663 = vadd.f32 %v591, %v662
    %v664 = vpop.f32.mrf.mxu0
    %665 = vdwg.mxu0
    %v666 = vmax.f32 %v652, 0.0
    %v667 = vmax.f32 %v655, 0.0
    %v668 = vmax.f32 %v660, 0.0
    %v669 = vmax.f32 %v663, 0.0
    %s670 = scalar_lea.vmem %s3, 96
    %v671 = vld [vmem:[%s670] sm:$0xff]
    %v672 = vld [vmem:[%s670 + $0x8] sm:$0xff]
    %v673 = vld [vmem:[%s670 + $0x10] sm:$0xff]
    %v674 = vld [vmem:[%s670 + $0x18] sm:$0xff]
    %s675 = scalar_lea.vmem %s4, 96
    %v676 = vld [vmem:[%s675] sm:$0xff]
    %v677 = vld [vmem:[%s675 + $0x8] sm:$0xff]
    %v678 = vld [vmem:[%s675 + $0x10] sm:$0xff]
    %v679 = vld [vmem:[%s675 + $0x18] sm:$0xff]
    %680 = vrot.lane.b32.xlu0 %v666, 2
    %v681 = vpop.permute.xlu0 %680
    %682 = vrot.lane.b32.xlu0 %v667, 2
    %v683 = vpop.permute.xlu0 %682
    %684 = vrot.lane.b32.xlu0 %v668, 2
    %v685 = vpop.permute.xlu0 %684
    %686 = vrot.lane.b32.xlu0 %v669, 2
    %v687 = vpop.permute.xlu0 %686
    %v688 = vmul.f32 %v681, %v164
    %v689 = vmul.f32 %v683, %v164
    %v690 = vmul.f32 %v685, %v164
    %v691 = vmul.f32 %v687, %v164
    %v692 = vpack.c.bf16 %v689, %v688
    %v693 = vpack.c.bf16 %v691, %v690
    %694 = vrot.lane.b32.xlu0 %v666, 1
    %v695 = vpop.permute.xlu0 %694
    %696 = vrot.lane.b32.xlu0 %v667, 1
    %v697 = vpop.permute.xlu0 %696
    %698 = vrot.lane.b32.xlu0 %v668, 1
    %v699 = vpop.permute.xlu0 %698
    %700 = vrot.lane.b32.xlu0 %v669, 1
    %v701 = vpop.permute.xlu0 %700
    %v702 = vmul.f32 %v695, %v184
    %v703 = vmul.f32 %v697, %v184
    %v704 = vmul.f32 %v699, %v184
    %v705 = vmul.f32 %v701, %v184
    %v706 = vpack.c.bf16 %v703, %v702
    %v707 = vpack.c.bf16 %v705, %v704
    %v708 = vpack.c.bf16 %v667, %v666
    %v709 = vpack.c.bf16 %v669, %v668
    %710 = vrot.lane.b32.xlu0 %v666, 127
    %v711 = vpop.permute.xlu0 %710
    %712 = vrot.lane.b32.xlu0 %v667, 127
    %v713 = vpop.permute.xlu0 %712
    %714 = vrot.lane.b32.xlu0 %v668, 127
    %v715 = vpop.permute.xlu0 %714
    %716 = vrot.lane.b32.xlu0 %v669, 127
    %v717 = vpop.permute.xlu0 %716
    %v718 = vmul.f32 %v711, %v206
    %v719 = vmul.f32 %v713, %v206
    %v720 = vmul.f32 %v715, %v206
    %v721 = vmul.f32 %v717, %v206
    %v722 = vpack.c.bf16 %v719, %v718
    %v723 = vpack.c.bf16 %v721, %v720
    %724 = vrot.lane.b32.xlu0 %v666, 126
    %v725 = vpop.permute.xlu0 %724
    %726 = vrot.lane.b32.xlu0 %v667, 126
    %v727 = vpop.permute.xlu0 %726
    %728 = vrot.lane.b32.xlu0 %v668, 126
    %v729 = vpop.permute.xlu0 %728
    %730 = vrot.lane.b32.xlu0 %v669, 126
    %v731 = vpop.permute.xlu0 %730
    %v732 = vmul.f32 %v725, %v226
    %v733 = vmul.f32 %v727, %v226
    %v734 = vmul.f32 %v729, %v226
    %v735 = vmul.f32 %v731, %v226
    %v736 = vpack.c.bf16 %v733, %v732
    %v737 = vpack.c.bf16 %v735, %v734
    %739 = vset.pattern.permute.xlu0 0
    %740 = vperm.xlu0 %739, %v676
    %v741 = vpop.permute.xlu0 %740
    %744 = vset.pattern.permute.xlu0 0
    %745 = vperm.xlu0 %744, %v677
    %v746 = vpop.permute.xlu0 %745
    %749 = vset.pattern.permute.xlu0 0
    %750 = vperm.xlu0 %749, %v678
    %v751 = vpop.permute.xlu0 %750
    %754 = vset.pattern.permute.xlu0 0
    %755 = vperm.xlu0 %754, %v679
    %v756 = vpop.permute.xlu0 %755
    %v762 = vunpack.c.l.b16 %v671
    %v763 = vunpack.c.h.b16 %v671
    %v764 = vunpack.c.l.b16 %v672
    %v765 = vunpack.c.h.b16 %v672
    %v766 = vunpack.c.l.b16 %v673
    %v767 = vunpack.c.h.b16 %v673
    %v768 = vunpack.c.l.b16 %v674
    %v769 = vunpack.c.h.b16 %v674
    %v770 = vpack.c.b16 %v764, %v762
    %v771 = vpack.c.b16 %v765, %v763
    %v772 = vpack.c.b16 %v768, %v766
    %v773 = vpack.c.b16 %v769, %v767
    %v777 = vsel %vm272, %v771, 0
    %v780 = vsel %vm272, %v773, 0
    %782 = vmatprep.subr.bf16.mxu0 0
    %783 = vmatpush1.bf16.msra.mxu0 %v723
    %784 = vmatprep.subr.bf16.mxu0 0
    %785 = vmatpush1.bf16.msra.mxu0 %v722
    %786 = vmatprep.subr.bf16.mxu0 0
    %787 = vmatpush1.bf16.msra.mxu0 %v709
    %788 = vmatprep.subr.bf16.mxu0 0
    %789 = vmatpush1.bf16.msra.mxu0 %v708
    %790 = vmatprep.subr.bf16.mxu0 0
    %791 = vmatpush1.bf16.msra.mxu0 %v707
    %792 = vmatprep.subr.bf16.mxu0 0
    %793 = vmatpush1.bf16.msra.mxu0 %v706
    %794 = vmatprep.subr.bf16.mxu0 0
    %795 = vmatpush1.bf16.msra.mxu0 %v693
    %796 = vmatprep.subr.bf16.mxu0 0
    %797 = vmatpush1.bf16.msra.mxu0 %v692
    %798 = vmatprep.subr.bf16.mxu0 0
    %799 = vmatpush2.bf16.msra.mxu0 0
    %800 = vmatprep.subr.bf16.mxu0 0
    %801 = vmatpush2.bf16.msra.mxu0 0
    %802 = vmatprep.subr.bf16.mxu0 0
    %803 = vmatpush2.bf16.msra.mxu0 0
    %804 = vmatprep.subr.bf16.mxu0 0
    %805 = vmatpush2.bf16.msra.mxu0 0
    %806 = vmatprep.subr.bf16.mxu0 0
    %807 = vmatpush2.bf16.msra.mxu0 0
    %808 = vmatprep.subr.bf16.mxu0 0
    %809 = vmatpush2.bf16.msra.mxu0 0
    %810 = vmatprep.subr.bf16.mxu0 0
    %811 = vmatpush2.bf16.msra.mxu0 %v737
    %812 = vmatprep.subr.bf16.mxu0 0
    %813 = vmatpush2.bf16.msra.mxu0 %v736
    %814 = vmatprep.mubr.bf16.mxu0 %v777
    %815 = vmatmul.mubr.bf16.gmra.mxu0 %v770
    %v816 = vpop.f32.mrf.mxu0
    %v817 = vadd.f32 %v741, %v816
    %v818 = vpop.f32.mrf.mxu0
    %v819 = vpop.f32.mrf.mxu0
    %v820 = vadd.f32 %v746, %v819
    %v821 = vpop.f32.mrf.mxu0
    %822 = vmatprep.mubr.bf16.mxu0 %v780
    %823 = vmatmul.mubr.bf16.gmra.mxu0 %v772
    %v824 = vpop.f32.mrf.mxu0
    %v825 = vadd.f32 %v751, %v824
    %v826 = vpop.f32.mrf.mxu0
    %v827 = vpop.f32.mrf.mxu0
    %v828 = vadd.f32 %v756, %v827
    %v829 = vpop.f32.mrf.mxu0
    %830 = vdwg.mxu0
    %v831 = vmul.f32 %v817, 0.3
    %v832 = vmul.f32 %v820, 0.3
    %v833 = vmul.f32 %v825, 0.3
    %v834 = vmul.f32 %v828, 0.3
    %v835 = vadd.f32 %v497, %v831
    %v836 = vadd.f32 %v498, %v832
    %v837 = vadd.f32 %v499, %v833
    %v838 = vadd.f32 %v500, %v834
    %v839 = vmax.f32 %v835, 0.0
    %v840 = vmax.f32 %v836, 0.0
    %v841 = vmax.f32 %v837, 0.0
    %v842 = vmax.f32 %v838, 0.0
    %s843 = scalar_lea.vmem %s3, 128
    %v844 = vld [vmem:[%s843] sm:$0xff]
    %v845 = vld [vmem:[%s843 + $0x8] sm:$0xff]
    %v846 = vld [vmem:[%s843 + $0x10] sm:$0xff]
    %v847 = vld [vmem:[%s843 + $0x18] sm:$0xff]
    %s848 = scalar_lea.vmem %s4, 128
    %v849 = vld [vmem:[%s848] sm:$0xff]
    %v850 = vld [vmem:[%s848 + $0x8] sm:$0xff]
    %v851 = vld [vmem:[%s848 + $0x10] sm:$0xff]
    %v852 = vld [vmem:[%s848 + $0x18] sm:$0xff]
    %853 = vrot.lane.b32.xlu0 %v839, 2
    %v854 = vpop.permute.xlu0 %853
    %855 = vrot.lane.b32.xlu0 %v840, 2
    %v856 = vpop.permute.xlu0 %855
    %857 = vrot.lane.b32.xlu0 %v841, 2
    %v858 = vpop.permute.xlu0 %857
    %859 = vrot.lane.b32.xlu0 %v842, 2
    %v860 = vpop.permute.xlu0 %859
    %v861 = vmul.f32 %v854, %v164
    %v862 = vmul.f32 %v856, %v164
    %v863 = vmul.f32 %v858, %v164
    %v864 = vmul.f32 %v860, %v164
    %v865 = vpack.c.bf16 %v862, %v861
    %v866 = vpack.c.bf16 %v864, %v863
    %867 = vrot.lane.b32.xlu0 %v839, 1
    %v868 = vpop.permute.xlu0 %867
    %869 = vrot.lane.b32.xlu0 %v840, 1
    %v870 = vpop.permute.xlu0 %869
    %871 = vrot.lane.b32.xlu0 %v841, 1
    %v872 = vpop.permute.xlu0 %871
    %873 = vrot.lane.b32.xlu0 %v842, 1
    %v874 = vpop.permute.xlu0 %873
    %v875 = vmul.f32 %v868, %v184
    %v876 = vmul.f32 %v870, %v184
    %v877 = vmul.f32 %v872, %v184
    %v878 = vmul.f32 %v874, %v184
    %v879 = vpack.c.bf16 %v876, %v875
    %v880 = vpack.c.bf16 %v878, %v877
    %v881 = vpack.c.bf16 %v840, %v839
    %v882 = vpack.c.bf16 %v842, %v841
    %883 = vrot.lane.b32.xlu0 %v839, 127
    %v884 = vpop.permute.xlu0 %883
    %885 = vrot.lane.b32.xlu0 %v840, 127
    %v886 = vpop.permute.xlu0 %885
    %887 = vrot.lane.b32.xlu0 %v841, 127
    %v888 = vpop.permute.xlu0 %887
    %889 = vrot.lane.b32.xlu0 %v842, 127
    %v890 = vpop.permute.xlu0 %889
    %v891 = vmul.f32 %v884, %v206
    %v892 = vmul.f32 %v886, %v206
    %v893 = vmul.f32 %v888, %v206
    %v894 = vmul.f32 %v890, %v206
    %v895 = vpack.c.bf16 %v892, %v891
    %v896 = vpack.c.bf16 %v894, %v893
    %897 = vrot.lane.b32.xlu0 %v839, 126
    %v898 = vpop.permute.xlu0 %897
    %899 = vrot.lane.b32.xlu0 %v840, 126
    %v900 = vpop.permute.xlu0 %899
    %901 = vrot.lane.b32.xlu0 %v841, 126
    %v902 = vpop.permute.xlu0 %901
    %903 = vrot.lane.b32.xlu0 %v842, 126
    %v904 = vpop.permute.xlu0 %903
    %v905 = vmul.f32 %v898, %v226
    %v906 = vmul.f32 %v900, %v226
    %v907 = vmul.f32 %v902, %v226
    %v908 = vmul.f32 %v904, %v226
    %v909 = vpack.c.bf16 %v906, %v905
    %v910 = vpack.c.bf16 %v908, %v907
    %912 = vset.pattern.permute.xlu0 0
    %913 = vperm.xlu0 %912, %v849
    %v914 = vpop.permute.xlu0 %913
    %917 = vset.pattern.permute.xlu0 0
    %918 = vperm.xlu0 %917, %v850
    %v919 = vpop.permute.xlu0 %918
    %922 = vset.pattern.permute.xlu0 0
    %923 = vperm.xlu0 %922, %v851
    %v924 = vpop.permute.xlu0 %923
    %927 = vset.pattern.permute.xlu0 0
    %928 = vperm.xlu0 %927, %v852
    %v929 = vpop.permute.xlu0 %928
    %v935 = vunpack.c.l.b16 %v844
    %v936 = vunpack.c.h.b16 %v844
    %v937 = vunpack.c.l.b16 %v845
    %v938 = vunpack.c.h.b16 %v845
    %v939 = vunpack.c.l.b16 %v846
    %v940 = vunpack.c.h.b16 %v846
    %v941 = vunpack.c.l.b16 %v847
    %v942 = vunpack.c.h.b16 %v847
    %v943 = vpack.c.b16 %v937, %v935
    %v944 = vpack.c.b16 %v938, %v936
    %v945 = vpack.c.b16 %v941, %v939
    %v946 = vpack.c.b16 %v942, %v940
    %v950 = vsel %vm272, %v944, 0
    %v953 = vsel %vm272, %v946, 0
    %955 = vmatprep.subr.bf16.mxu0 0
    %956 = vmatpush1.bf16.msra.mxu0 %v896
    %957 = vmatprep.subr.bf16.mxu0 0
    %958 = vmatpush1.bf16.msra.mxu0 %v895
    %959 = vmatprep.subr.bf16.mxu0 0
    %960 = vmatpush1.bf16.msra.mxu0 %v882
    %961 = vmatprep.subr.bf16.mxu0 0
    %962 = vmatpush1.bf16.msra.mxu0 %v881
    %963 = vmatprep.subr.bf16.mxu0 0
    %964 = vmatpush1.bf16.msra.mxu0 %v880
    %965 = vmatprep.subr.bf16.mxu0 0
    %966 = vmatpush1.bf16.msra.mxu0 %v879
    %967 = vmatprep.subr.bf16.mxu0 0
    %968 = vmatpush1.bf16.msra.mxu0 %v866
    %969 = vmatprep.subr.bf16.mxu0 0
    %970 = vmatpush1.bf16.msra.mxu0 %v865
    %971 = vmatprep.subr.bf16.mxu0 0
    %972 = vmatpush2.bf16.msra.mxu0 0
    %973 = vmatprep.subr.bf16.mxu0 0
    %974 = vmatpush2.bf16.msra.mxu0 0
    %975 = vmatprep.subr.bf16.mxu0 0
    %976 = vmatpush2.bf16.msra.mxu0 0
    %977 = vmatprep.subr.bf16.mxu0 0
    %978 = vmatpush2.bf16.msra.mxu0 0
    %979 = vmatprep.subr.bf16.mxu0 0
    %980 = vmatpush2.bf16.msra.mxu0 0
    %981 = vmatprep.subr.bf16.mxu0 0
    %982 = vmatpush2.bf16.msra.mxu0 0
    %983 = vmatprep.subr.bf16.mxu0 0
    %984 = vmatpush2.bf16.msra.mxu0 %v910
    %985 = vmatprep.subr.bf16.mxu0 0
    %986 = vmatpush2.bf16.msra.mxu0 %v909
    %987 = vmatprep.mubr.bf16.mxu0 %v950
    %988 = vmatmul.mubr.bf16.gmra.mxu0 %v943
    %v989 = vpop.f32.mrf.mxu0
    %v990 = vadd.f32 %v914, %v989
    %v991 = vpop.f32.mrf.mxu0
    %v992 = vpop.f32.mrf.mxu0
    %v993 = vadd.f32 %v919, %v992
    %v994 = vpop.f32.mrf.mxu0
    %995 = vmatprep.mubr.bf16.mxu0 %v953
    %996 = vmatmul.mubr.bf16.gmra.mxu0 %v945
    %v997 = vpop.f32.mrf.mxu0
    %v998 = vadd.f32 %v924, %v997
    %v999 = vpop.f32.mrf.mxu0
    %v1000 = vpop.f32.mrf.mxu0
    %v1001 = vadd.f32 %v929, %v1000
    %v1002 = vpop.f32.mrf.mxu0
    %1003 = vdwg.mxu0
    %v1004 = vmax.f32 %v990, 0.0
    %v1005 = vmax.f32 %v993, 0.0
    %v1006 = vmax.f32 %v998, 0.0
    %v1007 = vmax.f32 %v1001, 0.0
    %s1008 = scalar_lea.vmem %s3, 160
    %v1009 = vld [vmem:[%s1008] sm:$0xff]
    %v1010 = vld [vmem:[%s1008 + $0x8] sm:$0xff]
    %v1011 = vld [vmem:[%s1008 + $0x10] sm:$0xff]
    %v1012 = vld [vmem:[%s1008 + $0x18] sm:$0xff]
    %s1013 = scalar_lea.vmem %s4, 160
    %v1014 = vld [vmem:[%s1013] sm:$0xff]
    %v1015 = vld [vmem:[%s1013 + $0x8] sm:$0xff]
    %v1016 = vld [vmem:[%s1013 + $0x10] sm:$0xff]
    %v1017 = vld [vmem:[%s1013 + $0x18] sm:$0xff]
    %1018 = vrot.lane.b32.xlu0 %v1004, 2
    %v1019 = vpop.permute.xlu0 %1018
    %1020 = vrot.lane.b32.xlu0 %v1005, 2
    %v1021 = vpop.permute.xlu0 %1020
    %1022 = vrot.lane.b32.xlu0 %v1006, 2
    %v1023 = vpop.permute.xlu0 %1022
    %1024 = vrot.lane.b32.xlu0 %v1007, 2
    %v1025 = vpop.permute.xlu0 %1024
    %v1026 = vmul.f32 %v1019, %v164
    %v1027 = vmul.f32 %v1021, %v164
    %v1028 = vmul.f32 %v1023, %v164
    %v1029 = vmul.f32 %v1025, %v164
    %v1030 = vpack.c.bf16 %v1027, %v1026
    %v1031 = vpack.c.bf16 %v1029, %v1028
    %1032 = vrot.lane.b32.xlu0 %v1004, 1
    %v1033 = vpop.permute.xlu0 %1032
    %1034 = vrot.lane.b32.xlu0 %v1005, 1
    %v1035 = vpop.permute.xlu0 %1034
    %1036 = vrot.lane.b32.xlu0 %v1006, 1
    %v1037 = vpop.permute.xlu0 %1036
    %1038 = vrot.lane.b32.xlu0 %v1007, 1
    %v1039 = vpop.permute.xlu0 %1038
    %v1040 = vmul.f32 %v1033, %v184
    %v1041 = vmul.f32 %v1035, %v184
    %v1042 = vmul.f32 %v1037, %v184
    %v1043 = vmul.f32 %v1039, %v184
    %v1044 = vpack.c.bf16 %v1041, %v1040
    %v1045 = vpack.c.bf16 %v1043, %v1042
    %v1046 = vpack.c.bf16 %v1005, %v1004
    %v1047 = vpack.c.bf16 %v1007, %v1006
    %1048 = vrot.lane.b32.xlu0 %v1004, 127
    %v1049 = vpop.permute.xlu0 %1048
    %1050 = vrot.lane.b32.xlu0 %v1005, 127
    %v1051 = vpop.permute.xlu0 %1050
    %1052 = vrot.lane.b32.xlu0 %v1006, 127
    %v1053 = vpop.permute.xlu0 %1052
    %1054 = vrot.lane.b32.xlu0 %v1007, 127
    %v1055 = vpop.permute.xlu0 %1054
    %v1056 = vmul.f32 %v1049, %v206
    %v1057 = vmul.f32 %v1051, %v206
    %v1058 = vmul.f32 %v1053, %v206
    %v1059 = vmul.f32 %v1055, %v206
    %v1060 = vpack.c.bf16 %v1057, %v1056
    %v1061 = vpack.c.bf16 %v1059, %v1058
    %1062 = vrot.lane.b32.xlu0 %v1004, 126
    %v1063 = vpop.permute.xlu0 %1062
    %1064 = vrot.lane.b32.xlu0 %v1005, 126
    %v1065 = vpop.permute.xlu0 %1064
    %1066 = vrot.lane.b32.xlu0 %v1006, 126
    %v1067 = vpop.permute.xlu0 %1066
    %1068 = vrot.lane.b32.xlu0 %v1007, 126
    %v1069 = vpop.permute.xlu0 %1068
    %v1070 = vmul.f32 %v1063, %v226
    %v1071 = vmul.f32 %v1065, %v226
    %v1072 = vmul.f32 %v1067, %v226
    %v1073 = vmul.f32 %v1069, %v226
    %v1074 = vpack.c.bf16 %v1071, %v1070
    %v1075 = vpack.c.bf16 %v1073, %v1072
    %1077 = vset.pattern.permute.xlu0 0
    %1078 = vperm.xlu0 %1077, %v1014
    %v1079 = vpop.permute.xlu0 %1078
    %1082 = vset.pattern.permute.xlu0 0
    %1083 = vperm.xlu0 %1082, %v1015
    %v1084 = vpop.permute.xlu0 %1083
    %1087 = vset.pattern.permute.xlu0 0
    %1088 = vperm.xlu0 %1087, %v1016
    %v1089 = vpop.permute.xlu0 %1088
    %1092 = vset.pattern.permute.xlu0 0
    %1093 = vperm.xlu0 %1092, %v1017
    %v1094 = vpop.permute.xlu0 %1093
    %v1100 = vunpack.c.l.b16 %v1009
    %v1101 = vunpack.c.h.b16 %v1009
    %v1102 = vunpack.c.l.b16 %v1010
    %v1103 = vunpack.c.h.b16 %v1010
    %v1104 = vunpack.c.l.b16 %v1011
    %v1105 = vunpack.c.h.b16 %v1011
    %v1106 = vunpack.c.l.b16 %v1012
    %v1107 = vunpack.c.h.b16 %v1012
    %v1108 = vpack.c.b16 %v1102, %v1100
    %v1109 = vpack.c.b16 %v1103, %v1101
    %v1110 = vpack.c.b16 %v1106, %v1104
    %v1111 = vpack.c.b16 %v1107, %v1105
    %v1115 = vsel %vm272, %v1109, 0
    %v1118 = vsel %vm272, %v1111, 0
    %1120 = vmatprep.subr.bf16.mxu0 0
    %1121 = vmatpush1.bf16.msra.mxu0 %v1061
    %1122 = vmatprep.subr.bf16.mxu0 0
    %1123 = vmatpush1.bf16.msra.mxu0 %v1060
    %1124 = vmatprep.subr.bf16.mxu0 0
    %1125 = vmatpush1.bf16.msra.mxu0 %v1047
    %1126 = vmatprep.subr.bf16.mxu0 0
    %1127 = vmatpush1.bf16.msra.mxu0 %v1046
    %1128 = vmatprep.subr.bf16.mxu0 0
    %1129 = vmatpush1.bf16.msra.mxu0 %v1045
    %1130 = vmatprep.subr.bf16.mxu0 0
    %1131 = vmatpush1.bf16.msra.mxu0 %v1044
    %1132 = vmatprep.subr.bf16.mxu0 0
    %1133 = vmatpush1.bf16.msra.mxu0 %v1031
    %1134 = vmatprep.subr.bf16.mxu0 0
    %1135 = vmatpush1.bf16.msra.mxu0 %v1030
    %1136 = vmatprep.subr.bf16.mxu0 0
    %1137 = vmatpush2.bf16.msra.mxu0 0
    %1138 = vmatprep.subr.bf16.mxu0 0
    %1139 = vmatpush2.bf16.msra.mxu0 0
    %1140 = vmatprep.subr.bf16.mxu0 0
    %1141 = vmatpush2.bf16.msra.mxu0 0
    %1142 = vmatprep.subr.bf16.mxu0 0
    %1143 = vmatpush2.bf16.msra.mxu0 0
    %1144 = vmatprep.subr.bf16.mxu0 0
    %1145 = vmatpush2.bf16.msra.mxu0 0
    %1146 = vmatprep.subr.bf16.mxu0 0
    %1147 = vmatpush2.bf16.msra.mxu0 0
    %1148 = vmatprep.subr.bf16.mxu0 0
    %1149 = vmatpush2.bf16.msra.mxu0 %v1075
    %1150 = vmatprep.subr.bf16.mxu0 0
    %1151 = vmatpush2.bf16.msra.mxu0 %v1074
    %1152 = vmatprep.mubr.bf16.mxu0 %v1115
    %1153 = vmatmul.mubr.bf16.gmra.mxu0 %v1108
    %v1154 = vpop.f32.mrf.mxu0
    %v1155 = vadd.f32 %v1079, %v1154
    %v1156 = vpop.f32.mrf.mxu0
    %v1157 = vpop.f32.mrf.mxu0
    %v1158 = vadd.f32 %v1084, %v1157
    %v1159 = vpop.f32.mrf.mxu0
    %1160 = vmatprep.mubr.bf16.mxu0 %v1118
    %1161 = vmatmul.mubr.bf16.gmra.mxu0 %v1110
    %v1162 = vpop.f32.mrf.mxu0
    %v1163 = vadd.f32 %v1089, %v1162
    %v1164 = vpop.f32.mrf.mxu0
    %v1165 = vpop.f32.mrf.mxu0
    %v1166 = vadd.f32 %v1094, %v1165
    %v1167 = vpop.f32.mrf.mxu0
    %1168 = vdwg.mxu0
    %v1169 = vmul.f32 %v1155, 0.3
    %v1170 = vmul.f32 %v1158, 0.3
    %v1171 = vmul.f32 %v1163, 0.3
    %v1172 = vmul.f32 %v1166, 0.3
    %v1173 = vadd.f32 %v835, %v1169
    %v1174 = vadd.f32 %v836, %v1170
    %v1175 = vadd.f32 %v837, %v1171
    %v1176 = vadd.f32 %v838, %v1172
    %v1177 = vmax.f32 %v1173, 0.0
    %v1178 = vmax.f32 %v1174, 0.0
    %v1179 = vmax.f32 %v1175, 0.0
    %v1180 = vmax.f32 %v1176, 0.0
    %s1181 = scalar_lea.vmem %s3, 192
    %v1182 = vld [vmem:[%s1181] sm:$0xff]
    %v1183 = vld [vmem:[%s1181 + $0x8] sm:$0xff]
    %v1184 = vld [vmem:[%s1181 + $0x10] sm:$0xff]
    %v1185 = vld [vmem:[%s1181 + $0x18] sm:$0xff]
    %s1186 = scalar_lea.vmem %s4, 192
    %v1187 = vld [vmem:[%s1186] sm:$0xff]
    %v1188 = vld [vmem:[%s1186 + $0x8] sm:$0xff]
    %v1189 = vld [vmem:[%s1186 + $0x10] sm:$0xff]
    %v1190 = vld [vmem:[%s1186 + $0x18] sm:$0xff]
    %1191 = vrot.lane.b32.xlu0 %v1177, 2
    %v1192 = vpop.permute.xlu0 %1191
    %1193 = vrot.lane.b32.xlu0 %v1178, 2
    %v1194 = vpop.permute.xlu0 %1193
    %1195 = vrot.lane.b32.xlu0 %v1179, 2
    %v1196 = vpop.permute.xlu0 %1195
    %1197 = vrot.lane.b32.xlu0 %v1180, 2
    %v1198 = vpop.permute.xlu0 %1197
    %v1199 = vmul.f32 %v1192, %v164
    %v1200 = vmul.f32 %v1194, %v164
    %v1201 = vmul.f32 %v1196, %v164
    %v1202 = vmul.f32 %v1198, %v164
    %v1203 = vpack.c.bf16 %v1200, %v1199
    %v1204 = vpack.c.bf16 %v1202, %v1201
    %1205 = vrot.lane.b32.xlu0 %v1177, 1
    %v1206 = vpop.permute.xlu0 %1205
    %1207 = vrot.lane.b32.xlu0 %v1178, 1
    %v1208 = vpop.permute.xlu0 %1207
    %1209 = vrot.lane.b32.xlu0 %v1179, 1
    %v1210 = vpop.permute.xlu0 %1209
    %1211 = vrot.lane.b32.xlu0 %v1180, 1
    %v1212 = vpop.permute.xlu0 %1211
    %v1213 = vmul.f32 %v1206, %v184
    %v1214 = vmul.f32 %v1208, %v184
    %v1215 = vmul.f32 %v1210, %v184
    %v1216 = vmul.f32 %v1212, %v184
    %v1217 = vpack.c.bf16 %v1214, %v1213
    %v1218 = vpack.c.bf16 %v1216, %v1215
    %v1219 = vpack.c.bf16 %v1178, %v1177
    %v1220 = vpack.c.bf16 %v1180, %v1179
    %1221 = vrot.lane.b32.xlu0 %v1177, 127
    %v1222 = vpop.permute.xlu0 %1221
    %1223 = vrot.lane.b32.xlu0 %v1178, 127
    %v1224 = vpop.permute.xlu0 %1223
    %1225 = vrot.lane.b32.xlu0 %v1179, 127
    %v1226 = vpop.permute.xlu0 %1225
    %1227 = vrot.lane.b32.xlu0 %v1180, 127
    %v1228 = vpop.permute.xlu0 %1227
    %v1229 = vmul.f32 %v1222, %v206
    %v1230 = vmul.f32 %v1224, %v206
    %v1231 = vmul.f32 %v1226, %v206
    %v1232 = vmul.f32 %v1228, %v206
    %v1233 = vpack.c.bf16 %v1230, %v1229
    %v1234 = vpack.c.bf16 %v1232, %v1231
    %1235 = vrot.lane.b32.xlu0 %v1177, 126
    %v1236 = vpop.permute.xlu0 %1235
    %1237 = vrot.lane.b32.xlu0 %v1178, 126
    %v1238 = vpop.permute.xlu0 %1237
    %1239 = vrot.lane.b32.xlu0 %v1179, 126
    %v1240 = vpop.permute.xlu0 %1239
    %1241 = vrot.lane.b32.xlu0 %v1180, 126
    %v1242 = vpop.permute.xlu0 %1241
    %v1243 = vmul.f32 %v1236, %v226
    %v1244 = vmul.f32 %v1238, %v226
    %v1245 = vmul.f32 %v1240, %v226
    %v1246 = vmul.f32 %v1242, %v226
    %v1247 = vpack.c.bf16 %v1244, %v1243
    %v1248 = vpack.c.bf16 %v1246, %v1245
    %1250 = vset.pattern.permute.xlu0 0
    %1251 = vperm.xlu0 %1250, %v1187
    %v1252 = vpop.permute.xlu0 %1251
    %1255 = vset.pattern.permute.xlu0 0
    %1256 = vperm.xlu0 %1255, %v1188
    %v1257 = vpop.permute.xlu0 %1256
    %1260 = vset.pattern.permute.xlu0 0
    %1261 = vperm.xlu0 %1260, %v1189
    %v1262 = vpop.permute.xlu0 %1261
    %1265 = vset.pattern.permute.xlu0 0
    %1266 = vperm.xlu0 %1265, %v1190
    %v1267 = vpop.permute.xlu0 %1266
    %v1273 = vunpack.c.l.b16 %v1182
    %v1274 = vunpack.c.h.b16 %v1182
    %v1275 = vunpack.c.l.b16 %v1183
    %v1276 = vunpack.c.h.b16 %v1183
    %v1277 = vunpack.c.l.b16 %v1184
    %v1278 = vunpack.c.h.b16 %v1184
    %v1279 = vunpack.c.l.b16 %v1185
    %v1280 = vunpack.c.h.b16 %v1185
    %v1281 = vpack.c.b16 %v1275, %v1273
    %v1282 = vpack.c.b16 %v1276, %v1274
    %v1283 = vpack.c.b16 %v1279, %v1277
    %v1284 = vpack.c.b16 %v1280, %v1278
    %v1288 = vsel %vm272, %v1282, 0
    %v1291 = vsel %vm272, %v1284, 0
    %1293 = vmatprep.subr.bf16.mxu0 0
    %1294 = vmatpush1.bf16.msra.mxu0 %v1234
    %1295 = vmatprep.subr.bf16.mxu0 0
    %1296 = vmatpush1.bf16.msra.mxu0 %v1233
    %1297 = vmatprep.subr.bf16.mxu0 0
    %1298 = vmatpush1.bf16.msra.mxu0 %v1220
    %1299 = vmatprep.subr.bf16.mxu0 0
    %1300 = vmatpush1.bf16.msra.mxu0 %v1219
    %1301 = vmatprep.subr.bf16.mxu0 0
    %1302 = vmatpush1.bf16.msra.mxu0 %v1218
    %1303 = vmatprep.subr.bf16.mxu0 0
    %1304 = vmatpush1.bf16.msra.mxu0 %v1217
    %1305 = vmatprep.subr.bf16.mxu0 0
    %1306 = vmatpush1.bf16.msra.mxu0 %v1204
    %1307 = vmatprep.subr.bf16.mxu0 0
    %1308 = vmatpush1.bf16.msra.mxu0 %v1203
    %1309 = vmatprep.subr.bf16.mxu0 0
    %1310 = vmatpush2.bf16.msra.mxu0 0
    %1311 = vmatprep.subr.bf16.mxu0 0
    %1312 = vmatpush2.bf16.msra.mxu0 0
    %1313 = vmatprep.subr.bf16.mxu0 0
    %1314 = vmatpush2.bf16.msra.mxu0 0
    %1315 = vmatprep.subr.bf16.mxu0 0
    %1316 = vmatpush2.bf16.msra.mxu0 0
    %1317 = vmatprep.subr.bf16.mxu0 0
    %1318 = vmatpush2.bf16.msra.mxu0 0
    %1319 = vmatprep.subr.bf16.mxu0 0
    %1320 = vmatpush2.bf16.msra.mxu0 0
    %1321 = vmatprep.subr.bf16.mxu0 0
    %1322 = vmatpush2.bf16.msra.mxu0 %v1248
    %1323 = vmatprep.subr.bf16.mxu0 0
    %1324 = vmatpush2.bf16.msra.mxu0 %v1247
    %1325 = vmatprep.mubr.bf16.mxu0 %v1288
    %1326 = vmatmul.mubr.bf16.gmra.mxu0 %v1281
    %v1327 = vpop.f32.mrf.mxu0
    %v1328 = vadd.f32 %v1252, %v1327
    %v1329 = vpop.f32.mrf.mxu0
    %v1330 = vpop.f32.mrf.mxu0
    %v1331 = vadd.f32 %v1257, %v1330
    %v1332 = vpop.f32.mrf.mxu0
    %1333 = vmatprep.mubr.bf16.mxu0 %v1291
    %1334 = vmatmul.mubr.bf16.gmra.mxu0 %v1283
    %v1335 = vpop.f32.mrf.mxu0
    %v1336 = vadd.f32 %v1262, %v1335
    %v1337 = vpop.f32.mrf.mxu0
    %v1338 = vpop.f32.mrf.mxu0
    %v1339 = vadd.f32 %v1267, %v1338
    %v1340 = vpop.f32.mrf.mxu0
    %1341 = vdwg.mxu0
    %v1342 = vmax.f32 %v1328, 0.0
    %v1343 = vmax.f32 %v1331, 0.0
    %v1344 = vmax.f32 %v1336, 0.0
    %v1345 = vmax.f32 %v1339, 0.0
    %s1346 = scalar_lea.vmem %s3, 224
    %v1347 = vld [vmem:[%s1346] sm:$0xff]
    %v1348 = vld [vmem:[%s1346 + $0x8] sm:$0xff]
    %v1349 = vld [vmem:[%s1346 + $0x10] sm:$0xff]
    %v1350 = vld [vmem:[%s1346 + $0x18] sm:$0xff]
    %s1351 = scalar_lea.vmem %s4, 224
    %v1352 = vld [vmem:[%s1351] sm:$0xff]
    %v1353 = vld [vmem:[%s1351 + $0x8] sm:$0xff]
    %v1354 = vld [vmem:[%s1351 + $0x10] sm:$0xff]
    %v1355 = vld [vmem:[%s1351 + $0x18] sm:$0xff]
    %1356 = vrot.lane.b32.xlu0 %v1342, 2
    %v1357 = vpop.permute.xlu0 %1356
    %1358 = vrot.lane.b32.xlu0 %v1343, 2
    %v1359 = vpop.permute.xlu0 %1358
    %1360 = vrot.lane.b32.xlu0 %v1344, 2
    %v1361 = vpop.permute.xlu0 %1360
    %1362 = vrot.lane.b32.xlu0 %v1345, 2
    %v1363 = vpop.permute.xlu0 %1362
    %v1364 = vmul.f32 %v1357, %v164
    %v1365 = vmul.f32 %v1359, %v164
    %v1366 = vmul.f32 %v1361, %v164
    %v1367 = vmul.f32 %v1363, %v164
    %v1368 = vpack.c.bf16 %v1365, %v1364
    %v1369 = vpack.c.bf16 %v1367, %v1366
    %1370 = vrot.lane.b32.xlu0 %v1342, 1
    %v1371 = vpop.permute.xlu0 %1370
    %1372 = vrot.lane.b32.xlu0 %v1343, 1
    %v1373 = vpop.permute.xlu0 %1372
    %1374 = vrot.lane.b32.xlu0 %v1344, 1
    %v1375 = vpop.permute.xlu0 %1374
    %1376 = vrot.lane.b32.xlu0 %v1345, 1
    %v1377 = vpop.permute.xlu0 %1376
    %v1378 = vmul.f32 %v1371, %v184
    %v1379 = vmul.f32 %v1373, %v184
    %v1380 = vmul.f32 %v1375, %v184
    %v1381 = vmul.f32 %v1377, %v184
    %v1382 = vpack.c.bf16 %v1379, %v1378
    %v1383 = vpack.c.bf16 %v1381, %v1380
    %v1384 = vpack.c.bf16 %v1343, %v1342
    %v1385 = vpack.c.bf16 %v1345, %v1344
    %1386 = vrot.lane.b32.xlu0 %v1342, 127
    %v1387 = vpop.permute.xlu0 %1386
    %1388 = vrot.lane.b32.xlu0 %v1343, 127
    %v1389 = vpop.permute.xlu0 %1388
    %1390 = vrot.lane.b32.xlu0 %v1344, 127
    %v1391 = vpop.permute.xlu0 %1390
    %1392 = vrot.lane.b32.xlu0 %v1345, 127
    %v1393 = vpop.permute.xlu0 %1392
    %v1394 = vmul.f32 %v1387, %v206
    %v1395 = vmul.f32 %v1389, %v206
    %v1396 = vmul.f32 %v1391, %v206
    %v1397 = vmul.f32 %v1393, %v206
    %v1398 = vpack.c.bf16 %v1395, %v1394
    %v1399 = vpack.c.bf16 %v1397, %v1396
    %1400 = vrot.lane.b32.xlu0 %v1342, 126
    %v1401 = vpop.permute.xlu0 %1400
    %1402 = vrot.lane.b32.xlu0 %v1343, 126
    %v1403 = vpop.permute.xlu0 %1402
    %1404 = vrot.lane.b32.xlu0 %v1344, 126
    %v1405 = vpop.permute.xlu0 %1404
    %1406 = vrot.lane.b32.xlu0 %v1345, 126
    %v1407 = vpop.permute.xlu0 %1406
    %v1408 = vmul.f32 %v1401, %v226
    %v1409 = vmul.f32 %v1403, %v226
    %v1410 = vmul.f32 %v1405, %v226
    %v1411 = vmul.f32 %v1407, %v226
    %v1412 = vpack.c.bf16 %v1409, %v1408
    %v1413 = vpack.c.bf16 %v1411, %v1410
    %1415 = vset.pattern.permute.xlu0 0
    %1416 = vperm.xlu0 %1415, %v1352
    %v1417 = vpop.permute.xlu0 %1416
    %1420 = vset.pattern.permute.xlu0 0
    %1421 = vperm.xlu0 %1420, %v1353
    %v1422 = vpop.permute.xlu0 %1421
    %1425 = vset.pattern.permute.xlu0 0
    %1426 = vperm.xlu0 %1425, %v1354
    %v1427 = vpop.permute.xlu0 %1426
    %1430 = vset.pattern.permute.xlu0 0
    %1431 = vperm.xlu0 %1430, %v1355
    %v1432 = vpop.permute.xlu0 %1431
    %v1438 = vunpack.c.l.b16 %v1347
    %v1439 = vunpack.c.h.b16 %v1347
    %v1440 = vunpack.c.l.b16 %v1348
    %v1441 = vunpack.c.h.b16 %v1348
    %v1442 = vunpack.c.l.b16 %v1349
    %v1443 = vunpack.c.h.b16 %v1349
    %v1444 = vunpack.c.l.b16 %v1350
    %v1445 = vunpack.c.h.b16 %v1350
    %v1446 = vpack.c.b16 %v1440, %v1438
    %v1447 = vpack.c.b16 %v1441, %v1439
    %v1448 = vpack.c.b16 %v1444, %v1442
    %v1449 = vpack.c.b16 %v1445, %v1443
    %v1453 = vsel %vm272, %v1447, 0
    %v1456 = vsel %vm272, %v1449, 0
    %1458 = vmatprep.subr.bf16.mxu0 0
    %1459 = vmatpush1.bf16.msra.mxu0 %v1399
    %1460 = vmatprep.subr.bf16.mxu0 0
    %1461 = vmatpush1.bf16.msra.mxu0 %v1398
    %1462 = vmatprep.subr.bf16.mxu0 0
    %1463 = vmatpush1.bf16.msra.mxu0 %v1385
    %1464 = vmatprep.subr.bf16.mxu0 0
    %1465 = vmatpush1.bf16.msra.mxu0 %v1384
    %1466 = vmatprep.subr.bf16.mxu0 0
    %1467 = vmatpush1.bf16.msra.mxu0 %v1383
    %1468 = vmatprep.subr.bf16.mxu0 0
    %1469 = vmatpush1.bf16.msra.mxu0 %v1382
    %1470 = vmatprep.subr.bf16.mxu0 0
    %1471 = vmatpush1.bf16.msra.mxu0 %v1369
    %1472 = vmatprep.subr.bf16.mxu0 0
    %1473 = vmatpush1.bf16.msra.mxu0 %v1368
    %1474 = vmatprep.subr.bf16.mxu0 0
    %1475 = vmatpush2.bf16.msra.mxu0 0
    %1476 = vmatprep.subr.bf16.mxu0 0
    %1477 = vmatpush2.bf16.msra.mxu0 0
    %1478 = vmatprep.subr.bf16.mxu0 0
    %1479 = vmatpush2.bf16.msra.mxu0 0
    %1480 = vmatprep.subr.bf16.mxu0 0
    %1481 = vmatpush2.bf16.msra.mxu0 0
    %1482 = vmatprep.subr.bf16.mxu0 0
    %1483 = vmatpush2.bf16.msra.mxu0 0
    %1484 = vmatprep.subr.bf16.mxu0 0
    %1485 = vmatpush2.bf16.msra.mxu0 0
    %1486 = vmatprep.subr.bf16.mxu0 0
    %1487 = vmatpush2.bf16.msra.mxu0 %v1413
    %1488 = vmatprep.subr.bf16.mxu0 0
    %1489 = vmatpush2.bf16.msra.mxu0 %v1412
    %1490 = vmatprep.mubr.bf16.mxu0 %v1453
    %1491 = vmatmul.mubr.bf16.gmra.mxu0 %v1446
    %v1492 = vpop.f32.mrf.mxu0
    %v1493 = vadd.f32 %v1417, %v1492
    %v1494 = vpop.f32.mrf.mxu0
    %v1495 = vpop.f32.mrf.mxu0
    %v1496 = vadd.f32 %v1422, %v1495
    %v1497 = vpop.f32.mrf.mxu0
    %1498 = vmatprep.mubr.bf16.mxu0 %v1456
    %1499 = vmatmul.mubr.bf16.gmra.mxu0 %v1448
    %v1500 = vpop.f32.mrf.mxu0
    %v1501 = vadd.f32 %v1427, %v1500
    %v1502 = vpop.f32.mrf.mxu0
    %v1503 = vpop.f32.mrf.mxu0
    %v1504 = vadd.f32 %v1432, %v1503
    %v1505 = vpop.f32.mrf.mxu0
    %1506 = vdwg.mxu0
    %v1507 = vmul.f32 %v1493, 0.3
    %v1508 = vmul.f32 %v1496, 0.3
    %v1509 = vmul.f32 %v1501, 0.3
    %v1510 = vmul.f32 %v1504, 0.3
    %v1511 = vadd.f32 %v1173, %v1507
    %v1512 = vadd.f32 %v1174, %v1508
    %v1513 = vadd.f32 %v1175, %v1509
    %v1514 = vadd.f32 %v1176, %v1510
    %v1515 = vmax.f32 %v1511, 0.0
    %v1516 = vmax.f32 %v1512, 0.0
    %v1517 = vmax.f32 %v1513, 0.0
    %v1518 = vmax.f32 %v1514, 0.0
    %s1519 = scalar_lea.vmem %s3, 256
    %v1520 = vld [vmem:[%s1519] sm:$0xff]
    %v1521 = vld [vmem:[%s1519 + $0x8] sm:$0xff]
    %v1522 = vld [vmem:[%s1519 + $0x10] sm:$0xff]
    %v1523 = vld [vmem:[%s1519 + $0x18] sm:$0xff]
    %s1524 = scalar_lea.vmem %s4, 256
    %v1525 = vld [vmem:[%s1524] sm:$0xff]
    %v1526 = vld [vmem:[%s1524 + $0x8] sm:$0xff]
    %v1527 = vld [vmem:[%s1524 + $0x10] sm:$0xff]
    %v1528 = vld [vmem:[%s1524 + $0x18] sm:$0xff]
    %1529 = vrot.lane.b32.xlu0 %v1515, 2
    %v1530 = vpop.permute.xlu0 %1529
    %1531 = vrot.lane.b32.xlu0 %v1516, 2
    %v1532 = vpop.permute.xlu0 %1531
    %1533 = vrot.lane.b32.xlu0 %v1517, 2
    %v1534 = vpop.permute.xlu0 %1533
    %1535 = vrot.lane.b32.xlu0 %v1518, 2
    %v1536 = vpop.permute.xlu0 %1535
    %v1537 = vmul.f32 %v1530, %v164
    %v1538 = vmul.f32 %v1532, %v164
    %v1539 = vmul.f32 %v1534, %v164
    %v1540 = vmul.f32 %v1536, %v164
    %v1541 = vpack.c.bf16 %v1538, %v1537
    %v1542 = vpack.c.bf16 %v1540, %v1539
    %1543 = vrot.lane.b32.xlu0 %v1515, 1
    %v1544 = vpop.permute.xlu0 %1543
    %1545 = vrot.lane.b32.xlu0 %v1516, 1
    %v1546 = vpop.permute.xlu0 %1545
    %1547 = vrot.lane.b32.xlu0 %v1517, 1
    %v1548 = vpop.permute.xlu0 %1547
    %1549 = vrot.lane.b32.xlu0 %v1518, 1
    %v1550 = vpop.permute.xlu0 %1549
    %v1551 = vmul.f32 %v1544, %v184
    %v1552 = vmul.f32 %v1546, %v184
    %v1553 = vmul.f32 %v1548, %v184
    %v1554 = vmul.f32 %v1550, %v184
    %v1555 = vpack.c.bf16 %v1552, %v1551
    %v1556 = vpack.c.bf16 %v1554, %v1553
    %v1557 = vpack.c.bf16 %v1516, %v1515
    %v1558 = vpack.c.bf16 %v1518, %v1517
    %1559 = vrot.lane.b32.xlu0 %v1515, 127
    %v1560 = vpop.permute.xlu0 %1559
    %1561 = vrot.lane.b32.xlu0 %v1516, 127
    %v1562 = vpop.permute.xlu0 %1561
    %1563 = vrot.lane.b32.xlu0 %v1517, 127
    %v1564 = vpop.permute.xlu0 %1563
    %1565 = vrot.lane.b32.xlu0 %v1518, 127
    %v1566 = vpop.permute.xlu0 %1565
    %v1567 = vmul.f32 %v1560, %v206
    %v1568 = vmul.f32 %v1562, %v206
    %v1569 = vmul.f32 %v1564, %v206
    %v1570 = vmul.f32 %v1566, %v206
    %v1571 = vpack.c.bf16 %v1568, %v1567
    %v1572 = vpack.c.bf16 %v1570, %v1569
    %1573 = vrot.lane.b32.xlu0 %v1515, 126
    %v1574 = vpop.permute.xlu0 %1573
    %1575 = vrot.lane.b32.xlu0 %v1516, 126
    %v1576 = vpop.permute.xlu0 %1575
    %1577 = vrot.lane.b32.xlu0 %v1517, 126
    %v1578 = vpop.permute.xlu0 %1577
    %1579 = vrot.lane.b32.xlu0 %v1518, 126
    %v1580 = vpop.permute.xlu0 %1579
    %v1581 = vmul.f32 %v1574, %v226
    %v1582 = vmul.f32 %v1576, %v226
    %v1583 = vmul.f32 %v1578, %v226
    %v1584 = vmul.f32 %v1580, %v226
    %v1585 = vpack.c.bf16 %v1582, %v1581
    %v1586 = vpack.c.bf16 %v1584, %v1583
    %1588 = vset.pattern.permute.xlu0 0
    %1589 = vperm.xlu0 %1588, %v1525
    %v1590 = vpop.permute.xlu0 %1589
    %1593 = vset.pattern.permute.xlu0 0
    %1594 = vperm.xlu0 %1593, %v1526
    %v1595 = vpop.permute.xlu0 %1594
    %1598 = vset.pattern.permute.xlu0 0
    %1599 = vperm.xlu0 %1598, %v1527
    %v1600 = vpop.permute.xlu0 %1599
    %1603 = vset.pattern.permute.xlu0 0
    %1604 = vperm.xlu0 %1603, %v1528
    %v1605 = vpop.permute.xlu0 %1604
    %v1611 = vunpack.c.l.b16 %v1520
    %v1612 = vunpack.c.h.b16 %v1520
    %v1613 = vunpack.c.l.b16 %v1521
    %v1614 = vunpack.c.h.b16 %v1521
    %v1615 = vunpack.c.l.b16 %v1522
    %v1616 = vunpack.c.h.b16 %v1522
    %v1617 = vunpack.c.l.b16 %v1523
    %v1618 = vunpack.c.h.b16 %v1523
    %v1619 = vpack.c.b16 %v1613, %v1611
    %v1620 = vpack.c.b16 %v1614, %v1612
    %v1621 = vpack.c.b16 %v1617, %v1615
    %v1622 = vpack.c.b16 %v1618, %v1616
    %v1626 = vsel %vm272, %v1620, 0
    %v1629 = vsel %vm272, %v1622, 0
    %1631 = vmatprep.subr.bf16.mxu0 0
    %1632 = vmatpush1.bf16.msra.mxu0 %v1572
    %1633 = vmatprep.subr.bf16.mxu0 0
    %1634 = vmatpush1.bf16.msra.mxu0 %v1571
    %1635 = vmatprep.subr.bf16.mxu0 0
    %1636 = vmatpush1.bf16.msra.mxu0 %v1558
    %1637 = vmatprep.subr.bf16.mxu0 0
    %1638 = vmatpush1.bf16.msra.mxu0 %v1557
    %1639 = vmatprep.subr.bf16.mxu0 0
    %1640 = vmatpush1.bf16.msra.mxu0 %v1556
    %1641 = vmatprep.subr.bf16.mxu0 0
    %1642 = vmatpush1.bf16.msra.mxu0 %v1555
    %1643 = vmatprep.subr.bf16.mxu0 0
    %1644 = vmatpush1.bf16.msra.mxu0 %v1542
    %1645 = vmatprep.subr.bf16.mxu0 0
    %1646 = vmatpush1.bf16.msra.mxu0 %v1541
    %1647 = vmatprep.subr.bf16.mxu0 0
    %1648 = vmatpush2.bf16.msra.mxu0 0
    %1649 = vmatprep.subr.bf16.mxu0 0
    %1650 = vmatpush2.bf16.msra.mxu0 0
    %1651 = vmatprep.subr.bf16.mxu0 0
    %1652 = vmatpush2.bf16.msra.mxu0 0
    %1653 = vmatprep.subr.bf16.mxu0 0
    %1654 = vmatpush2.bf16.msra.mxu0 0
    %1655 = vmatprep.subr.bf16.mxu0 0
    %1656 = vmatpush2.bf16.msra.mxu0 0
    %1657 = vmatprep.subr.bf16.mxu0 0
    %1658 = vmatpush2.bf16.msra.mxu0 0
    %1659 = vmatprep.subr.bf16.mxu0 0
    %1660 = vmatpush2.bf16.msra.mxu0 %v1586
    %1661 = vmatprep.subr.bf16.mxu0 0
    %1662 = vmatpush2.bf16.msra.mxu0 %v1585
    %1663 = vmatprep.mubr.bf16.mxu0 %v1626
    %1664 = vmatmul.mubr.bf16.gmra.mxu0 %v1619
    %v1665 = vpop.f32.mrf.mxu0
    %v1666 = vadd.f32 %v1590, %v1665
    %v1667 = vpop.f32.mrf.mxu0
    %v1668 = vpop.f32.mrf.mxu0
    %v1669 = vadd.f32 %v1595, %v1668
    %v1670 = vpop.f32.mrf.mxu0
    %1671 = vmatprep.mubr.bf16.mxu0 %v1629
    %1672 = vmatmul.mubr.bf16.gmra.mxu0 %v1621
    %v1673 = vpop.f32.mrf.mxu0
    %v1674 = vadd.f32 %v1600, %v1673
    %v1675 = vpop.f32.mrf.mxu0
    %v1676 = vpop.f32.mrf.mxu0
    %v1677 = vadd.f32 %v1605, %v1676
    %v1678 = vpop.f32.mrf.mxu0
    %1679 = vdwg.mxu0
    %v1680 = vmax.f32 %v1666, 0.0
    %v1681 = vmax.f32 %v1669, 0.0
    %v1682 = vmax.f32 %v1674, 0.0
    %v1683 = vmax.f32 %v1677, 0.0
    %s1684 = scalar_lea.vmem %s3, 288
    %v1685 = vld [vmem:[%s1684] sm:$0xff]
    %v1686 = vld [vmem:[%s1684 + $0x8] sm:$0xff]
    %v1687 = vld [vmem:[%s1684 + $0x10] sm:$0xff]
    %v1688 = vld [vmem:[%s1684 + $0x18] sm:$0xff]
    %s1689 = scalar_lea.vmem %s4, 288
    %v1690 = vld [vmem:[%s1689] sm:$0xff]
    %v1691 = vld [vmem:[%s1689 + $0x8] sm:$0xff]
    %v1692 = vld [vmem:[%s1689 + $0x10] sm:$0xff]
    %v1693 = vld [vmem:[%s1689 + $0x18] sm:$0xff]
    %1694 = vrot.lane.b32.xlu0 %v1680, 2
    %v1695 = vpop.permute.xlu0 %1694
    %1696 = vrot.lane.b32.xlu0 %v1681, 2
    %v1697 = vpop.permute.xlu0 %1696
    %1698 = vrot.lane.b32.xlu0 %v1682, 2
    %v1699 = vpop.permute.xlu0 %1698
    %1700 = vrot.lane.b32.xlu0 %v1683, 2
    %v1701 = vpop.permute.xlu0 %1700
    %v1702 = vmul.f32 %v1695, %v164
    %v1703 = vmul.f32 %v1697, %v164
    %v1704 = vmul.f32 %v1699, %v164
    %v1705 = vmul.f32 %v1701, %v164
    %v1706 = vpack.c.bf16 %v1703, %v1702
    %v1707 = vpack.c.bf16 %v1705, %v1704
    %1708 = vrot.lane.b32.xlu0 %v1680, 1
    %v1709 = vpop.permute.xlu0 %1708
    %1710 = vrot.lane.b32.xlu0 %v1681, 1
    %v1711 = vpop.permute.xlu0 %1710
    %1712 = vrot.lane.b32.xlu0 %v1682, 1
    %v1713 = vpop.permute.xlu0 %1712
    %1714 = vrot.lane.b32.xlu0 %v1683, 1
    %v1715 = vpop.permute.xlu0 %1714
    %v1716 = vmul.f32 %v1709, %v184
    %v1717 = vmul.f32 %v1711, %v184
    %v1718 = vmul.f32 %v1713, %v184
    %v1719 = vmul.f32 %v1715, %v184
    %v1720 = vpack.c.bf16 %v1717, %v1716
    %v1721 = vpack.c.bf16 %v1719, %v1718
    %v1722 = vpack.c.bf16 %v1681, %v1680
    %v1723 = vpack.c.bf16 %v1683, %v1682
    %1724 = vrot.lane.b32.xlu0 %v1680, 127
    %v1725 = vpop.permute.xlu0 %1724
    %1726 = vrot.lane.b32.xlu0 %v1681, 127
    %v1727 = vpop.permute.xlu0 %1726
    %1728 = vrot.lane.b32.xlu0 %v1682, 127
    %v1729 = vpop.permute.xlu0 %1728
    %1730 = vrot.lane.b32.xlu0 %v1683, 127
    %v1731 = vpop.permute.xlu0 %1730
    %v1732 = vmul.f32 %v1725, %v206
    %v1733 = vmul.f32 %v1727, %v206
    %v1734 = vmul.f32 %v1729, %v206
    %v1735 = vmul.f32 %v1731, %v206
    %v1736 = vpack.c.bf16 %v1733, %v1732
    %v1737 = vpack.c.bf16 %v1735, %v1734
    %1738 = vrot.lane.b32.xlu0 %v1680, 126
    %v1739 = vpop.permute.xlu0 %1738
    %1740 = vrot.lane.b32.xlu0 %v1681, 126
    %v1741 = vpop.permute.xlu0 %1740
    %1742 = vrot.lane.b32.xlu0 %v1682, 126
    %v1743 = vpop.permute.xlu0 %1742
    %1744 = vrot.lane.b32.xlu0 %v1683, 126
    %v1745 = vpop.permute.xlu0 %1744
    %v1746 = vmul.f32 %v1739, %v226
    %v1747 = vmul.f32 %v1741, %v226
    %v1748 = vmul.f32 %v1743, %v226
    %v1749 = vmul.f32 %v1745, %v226
    %v1750 = vpack.c.bf16 %v1747, %v1746
    %v1751 = vpack.c.bf16 %v1749, %v1748
    %1753 = vset.pattern.permute.xlu0 0
    %1754 = vperm.xlu0 %1753, %v1690
    %v1755 = vpop.permute.xlu0 %1754
    %1758 = vset.pattern.permute.xlu0 0
    %1759 = vperm.xlu0 %1758, %v1691
    %v1760 = vpop.permute.xlu0 %1759
    %1763 = vset.pattern.permute.xlu0 0
    %1764 = vperm.xlu0 %1763, %v1692
    %v1765 = vpop.permute.xlu0 %1764
    %1768 = vset.pattern.permute.xlu0 0
    %1769 = vperm.xlu0 %1768, %v1693
    %v1770 = vpop.permute.xlu0 %1769
    %v1776 = vunpack.c.l.b16 %v1685
    %v1777 = vunpack.c.h.b16 %v1685
    %v1778 = vunpack.c.l.b16 %v1686
    %v1779 = vunpack.c.h.b16 %v1686
    %v1780 = vunpack.c.l.b16 %v1687
    %v1781 = vunpack.c.h.b16 %v1687
    %v1782 = vunpack.c.l.b16 %v1688
    %v1783 = vunpack.c.h.b16 %v1688
    %v1784 = vpack.c.b16 %v1778, %v1776
    %v1785 = vpack.c.b16 %v1779, %v1777
    %v1786 = vpack.c.b16 %v1782, %v1780
    %v1787 = vpack.c.b16 %v1783, %v1781
    %v1791 = vsel %vm272, %v1785, 0
    %v1794 = vsel %vm272, %v1787, 0
    %1796 = vmatprep.subr.bf16.mxu0 0
    %1797 = vmatpush1.bf16.msra.mxu0 %v1737
    %1798 = vmatprep.subr.bf16.mxu0 0
    %1799 = vmatpush1.bf16.msra.mxu0 %v1736
    %1800 = vmatprep.subr.bf16.mxu0 0
    %1801 = vmatpush1.bf16.msra.mxu0 %v1723
    %1802 = vmatprep.subr.bf16.mxu0 0
    %1803 = vmatpush1.bf16.msra.mxu0 %v1722
    %1804 = vmatprep.subr.bf16.mxu0 0
    %1805 = vmatpush1.bf16.msra.mxu0 %v1721
    %1806 = vmatprep.subr.bf16.mxu0 0
    %1807 = vmatpush1.bf16.msra.mxu0 %v1720
    %1808 = vmatprep.subr.bf16.mxu0 0
    %1809 = vmatpush1.bf16.msra.mxu0 %v1707
    %1810 = vmatprep.subr.bf16.mxu0 0
    %1811 = vmatpush1.bf16.msra.mxu0 %v1706
    %1812 = vmatprep.subr.bf16.mxu0 0
    %1813 = vmatpush2.bf16.msra.mxu0 0
    %1814 = vmatprep.subr.bf16.mxu0 0
    %1815 = vmatpush2.bf16.msra.mxu0 0
    %1816 = vmatprep.subr.bf16.mxu0 0
    %1817 = vmatpush2.bf16.msra.mxu0 0
    %1818 = vmatprep.subr.bf16.mxu0 0
    %1819 = vmatpush2.bf16.msra.mxu0 0
    %1820 = vmatprep.subr.bf16.mxu0 0
    %1821 = vmatpush2.bf16.msra.mxu0 0
    %1822 = vmatprep.subr.bf16.mxu0 0
    %1823 = vmatpush2.bf16.msra.mxu0 0
    %1824 = vmatprep.subr.bf16.mxu0 0
    %1825 = vmatpush2.bf16.msra.mxu0 %v1751
    %1826 = vmatprep.subr.bf16.mxu0 0
    %1827 = vmatpush2.bf16.msra.mxu0 %v1750
    %1828 = vmatprep.mubr.bf16.mxu0 %v1791
    %1829 = vmatmul.mubr.bf16.gmra.mxu0 %v1784
    %v1830 = vpop.f32.mrf.mxu0
    %v1831 = vadd.f32 %v1755, %v1830
    %v1832 = vpop.f32.mrf.mxu0
    %v1833 = vpop.f32.mrf.mxu0
    %v1834 = vadd.f32 %v1760, %v1833
    %v1835 = vpop.f32.mrf.mxu0
    %1836 = vmatprep.mubr.bf16.mxu0 %v1794
    %1837 = vmatmul.mubr.bf16.gmra.mxu0 %v1786
    %v1838 = vpop.f32.mrf.mxu0
    %v1839 = vadd.f32 %v1765, %v1838
    %v1840 = vpop.f32.mrf.mxu0
    %v1841 = vpop.f32.mrf.mxu0
    %v1842 = vadd.f32 %v1770, %v1841
    %v1843 = vpop.f32.mrf.mxu0
    %1844 = vdwg.mxu0
    %v1845 = vmul.f32 %v1831, 0.3
    %v1846 = vmul.f32 %v1834, 0.3
    %v1847 = vmul.f32 %v1839, 0.3
    %v1848 = vmul.f32 %v1842, 0.3
    %v1849 = vadd.f32 %v1511, %v1845
    %v1850 = vadd.f32 %v1512, %v1846
    %v1851 = vadd.f32 %v1513, %v1847
    %v1852 = vadd.f32 %v1514, %v1848
    %v1853 = vld [vmem:[%s5] sm:$0xff]
    %v1854 = vld [vmem:[%s5 + $0x8] sm:$0xff]
    %v1855 = vld [vmem:[%s5 + $0x10] sm:$0xff]
    %v1856 = vld [vmem:[%s5 + $0x18] sm:$0xff]
    %v1857 = vmul.f32 %v1849, %v1853
    %v1858 = vmul.f32 %v1850, %v1854
    %v1859 = vmul.f32 %v1851, %v1855
    %v1860 = vmul.f32 %v1852, %v1856
    %v1861 = vadd.f32 %v1857, %v1858
    %v1862 = vadd.f32 %v1861, %v1859
    %v1863 = vadd.f32 %v1862, %v1860
    %v1864 = vrot.slane %v1863, 4
    %v1865 = vadd.f32 %v1863, %v1864
    %v1866 = vrot.slane %v1865, 2
    %v1867 = vadd.f32 %v1865, %v1866
    %v1868 = vrot.slane %v1867, 1
    %v1869 = vadd.f32 %v1867, %v1868
    %1870 = vrot.lane.b32.xlu0 %v1869, 1
    %v1871 = vpop.permute.xlu0 %1870
    %v1872 = vadd.f32 %v1869, %v1871
    %1873 = vrot.lane.b32.xlu0 %v1869, 2
    %v1874 = vpop.permute.xlu0 %1873
    %v1875 = vadd.f32 %v1872, %v1874
    %1876 = vrot.lane.b32.xlu0 %v1869, 3
    %v1877 = vpop.permute.xlu0 %1876
    %v1878 = vadd.f32 %v1875, %v1877
    %1879 = vrot.lane.b32.xlu0 %v1869, 4
    %v1880 = vpop.permute.xlu0 %1879
    %v1881 = vadd.f32 %v1878, %v1880
    %1882 = vrot.lane.b32.xlu0 %v1869, 5
    %v1883 = vpop.permute.xlu0 %1882
    %v1884 = vadd.f32 %v1881, %v1883
    %1885 = vrot.lane.b32.xlu0 %v1869, 6
    %v1886 = vpop.permute.xlu0 %1885
    %v1887 = vadd.f32 %v1884, %v1886
    %1888 = vrot.lane.b32.xlu0 %v1869, 7
    %v1889 = vpop.permute.xlu0 %1888
    %v1890 = vadd.f32 %v1887, %v1889
    %v1891 = vld [vmem:[#allocation2] sm:$0x1]
    %1893 = vset.pattern.permute.xlu0 0
    %1894 = vperm.xlu0 %1893, %v1891
    %v1895 = vpop.permute.xlu0 %1894
    %v1897 = vlaneseq
    %v1898 = vshrl.u32 %v1897, 7
    %v1899 = vsub.s32 0, %v1898
    %v1900 = vrot.slane %v1895, %v1899
    %v1901 = vadd.f32 %v1890, %v1900
    %v1902 = vsub.f32 0.0, %v1901
    %v1903 = vmul.f32 %v1902, 1.442695
    %v1904 = vpow.pop %v1903
    %v1905 = vadd.f32 %v1904, 1.0
    %v1906 = vrcp.pop %v1905
    %v1907 = vmul.f32 1.0, %v1906
    %1908 = vst [vmem:[#allocation3] sm:$0x1] %v1907
    // Predicated region
    $region34: #{tpu_custom_call.1} parent=1 // pred_check
      _
    $region35: #{tpu_custom_call.1} parent=1 // pred_check_branch
      %1910 = sbr.rel (0) target = $region37
    $region36: #{tpu_custom_call.1} parent=1 // pred_region
      %s1912 = ssub.s32 16, 16
      %1913 = vsyncadd [#allocation4], %s1912
      %s1915 = sshll.u32 [#allocation3], 4
      %s1916 = int_to_ptr.vmem [resolvable:$true] %s1915
      %1918 = dma.vmem_to_hbm [thread:$0]  %s1916, 16, %s8, [#allocation4]
    $region37: #{tpu_custom_call.1} parent=1 // pred_fallthru
      _
    // Predicated region
    $region38: #{tpu_custom_call.1} parent=1 // pred_check
      _
    $region39: #{tpu_custom_call.1} parent=1 // pred_check_branch
      %1920 = sbr.rel (0) target = $region41
    $region40: #{tpu_custom_call.1} parent=1 // pred_region
      %1921 = dma.done [#allocation4], 16
    $region41: #{tpu_custom_call.1} parent=1 // pred_fallthru
      _
    %1922 = vsyncpa [#allocation4], 1

</llo_original>
